<compile_context>
chip_gen: v5e
topology: v5e:2x2
jax: 0.10.0
libtpu: 0.0.40
codegen_flags: <defaults>
</compile_context>

<pallas_src>
import jax
import jax.numpy as jnp
from jax.experimental import pallas as pl
from jax.experimental.pallas import tpu as pltpu

N_EMBD = 384                 # n_embd from the source module
FF_HIDDEN = 4 * N_EMBD       # 1536
# TODO(synk): nn.Dropout(0.2) is treated as identity (eval-mode semantics).


# ------------------------------- kernel ---------------------------------------
def _ffn_kernel(x_ref, w1_ref, b1_ref, w2_ref, b2_ref, o_ref, acc_ref):
    """One (block_m, C) row tile x one block_h hidden chunk of the FFN.

    grid = (row_tiles [parallel], hidden_tiles [arbitrary]); a float32 VMEM
    accumulator holds the partial second matmul and is finalized (bias add,
    cast) on the last hidden chunk.
    """
    j = pl.program_id(1)

    @pl.when(j == 0)
    def _():
        acc_ref[...] = jnp.zeros_like(acc_ref)

    x_bf16 = x_ref[...].astype(jnp.bfloat16)                        # (bm, C)
    h = jnp.dot(x_bf16, w1_ref[...],
                preferred_element_type=jnp.float32) + b1_ref[...]   # (bm, bh) f32
    h = jnp.maximum(h, 0.0)                                         # ReLU in f32
    acc_ref[...] += jnp.dot(h.astype(jnp.bfloat16), w2_ref[...],
                            preferred_element_type=jnp.float32)     # (bm, C) f32

    @pl.when(j == pl.num_programs(1) - 1)
    def _():
        o_ref[...] = (acc_ref[...] + b2_ref[...]).astype(o_ref.dtype)


# ------------------------------- wrapper ---------------------------------------
def feed_forward(x, params, *, block_m=None, block_h=512):
    """x: (B, T, C) float32. Returns (B, T, C) float32."""
    B, T, C = x.shape
    H = params["w1"].shape[1]
    M = B * T
    x2 = x.reshape(M, C)                     # fold batch+seq into matmul M dim

    if block_m is None:
        # Up to 2 row tiles -> 2 "parallel" grid points (keeps both v7x TCs
        # busy); second-to-last block dim must remain a multiple of 8.
        block_m = M // 2 if (M % 2 == 0 and (M // 2) % 8 == 0) else M
    block_h = min(block_h, H)
    assert M % block_m == 0 and H % block_h == 0
    assert C % 128 == 0 and block_h % 128 == 0

    grid = (M // block_m, H // block_h)

    out = pl.pallas_call(
        _ffn_kernel,
        out_shape=jax.ShapeDtypeStruct((M, C), jnp.float32),
        grid=grid,
        in_specs=[
            pl.BlockSpec((block_m, C), lambda i, j: (i, 0)),   # x row tile
            pl.BlockSpec((C, block_h), lambda i, j: (0, j)),   # w1 hidden chunk
            pl.BlockSpec((1, block_h), lambda i, j: (0, j)),   # b1 hidden chunk
            pl.BlockSpec((block_h, C), lambda i, j: (j, 0)),   # w2 hidden chunk
            pl.BlockSpec((1, C),       lambda i, j: (0, 0)),   # b2 (invariant)
        ],
        out_specs=pl.BlockSpec((block_m, C), lambda i, j: (i, 0)),
        scratch_shapes=[pltpu.VMEM((block_m, C), jnp.float32)],
        compiler_params=pltpu.CompilerParams(
            dimension_semantics=("parallel", "arbitrary")),
    )(x2, params["w1"], params["b1"], params["w2"], params["b2"])
    return out.reshape(B, T, C)


# ----------------------------- params & references ------------------------------
def init_params(key, n_embd=N_EMBD, hidden=FF_HIDDEN):
    k1, k2, k3, k4 = jax.random.split(key, 4)
    w1 = jax.random.normal(k1, (n_embd, hidden), jnp.float32) * 0.02
    w2 = jax.random.normal(k2, (hidden, n_embd), jnp.float32) * 0.02
    b1 = jax.random.normal(k3, (1, hidden), jnp.float32) * 0.02
    b2 = jax.random.normal(k4, (1, n_embd), jnp.float32) * 0.02
    kernel_params = {"w1": w1.astype(jnp.bfloat16), "b1": b1,
                     "w2": w2.astype(jnp.bfloat16), "b2": b2}
    ref_params = {"w1": w1, "b1": b1, "w2": w2, "b2": b2}
    return kernel_params, ref_params


def ref_forward_f32(x2, p):
    """Pure-f32 reference == PyTorch eval-mode FeedForward."""
    h = jnp.maximum(x2 @ p["w1"] + p["b1"], 0.0)
    return h @ p["w2"] + p["b2"]


def ref_forward_bf16(x2, p):
    """Same mixed precision as the kernel: bf16 MXU inputs, f32 accumulation."""
    h = jnp.dot(x2.astype(jnp.bfloat16), p["w1"],
                preferred_element_type=jnp.float32) + p["b1"]
    h = jnp.maximum(h, 0.0)
    return jnp.dot(h.astype(jnp.bfloat16), p["w2"],
                   preferred_element_type=jnp.float32) + p["b2"]


# ------------------------------------ main ---------------------------------------
if __name__ == "__main__":
    key = jax.random.PRNGKey(0)
    pkey, xkey = jax.random.split(key)
    kparams, rparams = init_params(pkey)

    B, T = 2, 16
    x = jax.random.normal(xkey, (B, T, N_EMBD), jnp.float32)

    y = jax.block_until_ready(feed_forward(x, kparams))
    assert y.shape == (B, T, N_EMBD)

    x2 = x.reshape(B * T, N_EMBD)
    y_bf16 = ref_forward_bf16(x2, kparams).reshape(B, T, N_EMBD)   # exact kernel math
    y_f32 = ref_forward_f32(x2, rparams).reshape(B, T, N_EMBD)     # module semantics

    err_bf16 = float(jnp.max(jnp.abs(y - y_bf16)))
    err_f32 = float(jnp.max(jnp.abs(y - y_f32)))
    assert err_bf16 < 2e-3, f"mixed-precision reference mismatch: {err_bf16}"
    assert err_f32 < 5e-2, f"f32-semantics mismatch: {err_f32}"
    print("KERNEL_OK")
</pallas_src>

<mosaic_0001>
module attributes {stable_mosaic.version = 11 : i64} {
  func.func @_ffn_kernel(%arg0: i32, %arg1: i32, %arg2: memref<16x384xf32, #tpu.memory_space<vmem>>, %arg3: memref<384x512xbf16, #tpu.memory_space<vmem>>, %arg4: memref<1x512xf32, #tpu.memory_space<vmem>>, %arg5: memref<512x384xbf16, #tpu.memory_space<vmem>>, %arg6: memref<1x384xf32, #tpu.memory_space<vmem>>, %arg7: memref<16x384xf32, #tpu.memory_space<vmem>>, %arg8: memref<16x384xf32, #tpu.memory_space<vmem>>) attributes {dimension_semantics = [#tpu.dimension_semantics<parallel>, #tpu.dimension_semantics<arbitrary>], iteration_bounds = array<i64: 2, 3>, scalar_prefetch = 0 : i64, scratch_operands = 1 : i64, tpu.core_type = #tpu.core_type<tc>, window_params = [{transform_indices = @transform_0, window_bounds = array<i64: 16, 384>}, {transform_indices = @transform_1, window_bounds = array<i64: 384, 512>}, {transform_indices = @transform_2, window_bounds = array<i64: 1, 512>}, {transform_indices = @transform_3, window_bounds = array<i64: 512, 384>}, {pipeline_mode = #tpu.pipeline_mode<synchronous>, transform_indices = @transform_4, window_bounds = array<i64: 1, 384>}, {transform_indices = @transform_5, window_bounds = array<i64: 16, 384>}]} {
    %c0_i32 = arith.constant 0 : i32
    %0 = arith.cmpi eq, %arg1, %c0_i32 : i32
    %1 = arith.extui %0 : i1 to i32
    %c0_i32_0 = arith.constant 0 : i32
    %2 = arith.cmpi ne, %1, %c0_i32_0 : i32
    scf.if %2 {
      %cst_15 = arith.constant 0.000000e+00 : f32
      %21 = vector.broadcast %cst_15 : f32 to vector<16x384xf32>
      %c0_16 = arith.constant 0 : index
      %c0_17 = arith.constant 0 : index
      %22 = vector.load %arg8[%c0_16, %c0_17] : memref<16x384xf32, #tpu.memory_space<vmem>>, vector<16x384xf32>
      tpu.vector_store %arg8[%c0_16, %c0_17], %21 {strides = array<i32>} : memref<16x384xf32, #tpu.memory_space<vmem>>, vector<16x384xf32>,
    } else {
    }
    %c0 = arith.constant 0 : index
    %c0_1 = arith.constant 0 : index
    %3 = vector.load %arg2[%c0, %c0_1] : memref<16x384xf32, #tpu.memory_space<vmem>>, vector<16x384xf32>
    %4 = arith.truncf %3 : vector<16x384xf32> to vector<16x384xbf16>
    %c0_2 = arith.constant 0 : index
    %c0_3 = arith.constant 0 : index
    %5 = vector.load %arg3[%c0_2, %c0_3] : memref<384x512xbf16, #tpu.memory_space<vmem>>, vector<384x512xbf16>
    %cst = arith.constant dense<0.000000e+00> : vector<16x512xf32>
    %6 = tpu.matmul %4, %5, %cst {dimension_numbers = #tpu.dot_dimension_numbers<[1], [0], [0], [1], [0, 0, 1, 1], [], []>} : vector<16x384xbf16>, vector<384x512xbf16>, vector<16x512xf32> -> vector<16x512xf32>
    %c0_4 = arith.constant 0 : index
    %c0_5 = arith.constant 0 : index
    %7 = vector.load %arg4[%c0_4, %c0_5] : memref<1x512xf32, #tpu.memory_space<vmem>>, vector<1x512xf32>
    %8 = vector.broadcast %7 : vector<1x512xf32> to vector<16x512xf32>
    %9 = arith.addf %6, %8 : vector<16x512xf32>
    %cst_6 = arith.constant 0.000000e+00 : f32
    %10 = vector.broadcast %cst_6 : f32 to vector<16x512xf32>
    %11 = arith.maximumf %9, %10 : vector<16x512xf32>
    %c0_7 = arith.constant 0 : index
    %c0_8 = arith.constant 0 : index
    %12 = vector.load %arg8[%c0_7, %c0_8] : memref<16x384xf32, #tpu.memory_space<vmem>>, vector<16x384xf32>
    %13 = arith.truncf %11 : vector<16x512xf32> to vector<16x512xbf16>
    %c0_9 = arith.constant 0 : index
    %c0_10 = arith.constant 0 : index
    %14 = vector.load %arg5[%c0_9, %c0_10] : memref<512x384xbf16, #tpu.memory_space<vmem>>, vector<512x384xbf16>
    %cst_11 = arith.constant dense<0.000000e+00> : vector<16x384xf32>
    %15 = tpu.matmul %13, %14, %cst_11 {dimension_numbers = #tpu.dot_dimension_numbers<[1], [0], [0], [1], [0, 0, 1, 1], [], []>} : vector<16x512xbf16>, vector<512x384xbf16>, vector<16x384xf32> -> vector<16x384xf32>
    %16 = arith.addf %12, %15 : vector<16x384xf32>
    %c0_12 = arith.constant 0 : index
    %c0_13 = arith.constant 0 : index
    %17 = vector.load %arg8[%c0_12, %c0_13] : memref<16x384xf32, #tpu.memory_space<vmem>>, vector<16x384xf32>
    tpu.vector_store %arg8[%c0_12, %c0_13], %16 {strides = array<i32>} : memref<16x384xf32, #tpu.memory_space<vmem>>, vector<16x384xf32>,
    %c2_i32 = arith.constant 2 : i32
    %18 = arith.cmpi eq, %arg1, %c2_i32 : i32
    %19 = arith.extui %18 : i1 to i32
    %c0_i32_14 = arith.constant 0 : i32
    %20 = arith.cmpi ne, %19, %c0_i32_14 : i32
    scf.if %20 {
      %c0_15 = arith.constant 0 : index
      %c0_16 = arith.constant 0 : index
      %21 = vector.load %arg8[%c0_15, %c0_16] : memref<16x384xf32, #tpu.memory_space<vmem>>, vector<16x384xf32>
      %c0_17 = arith.constant 0 : index
      %c0_18 = arith.constant 0 : index
      %22 = vector.load %arg6[%c0_17, %c0_18] : memref<1x384xf32, #tpu.memory_space<vmem>>, vector<1x384xf32>
      %23 = vector.broadcast %22 : vector<1x384xf32> to vector<16x384xf32>
      %24 = arith.addf %21, %23 : vector<16x384xf32>
      %c0_19 = arith.constant 0 : index
      %c0_20 = arith.constant 0 : index
      %25 = vector.load %arg7[%c0_19, %c0_20] : memref<16x384xf32, #tpu.memory_space<vmem>>, vector<16x384xf32>
      tpu.vector_store %arg7[%c0_19, %c0_20], %24 {strides = array<i32>} : memref<16x384xf32, #tpu.memory_space<vmem>>, vector<16x384xf32>,
    } else {
    }
    return
  }
  func.func @transform_0(%arg0: i32, %arg1: i32) -> (i32, i32) {
    %c0_i32 = arith.constant 0 : i32
    %c0_i32_0 = arith.constant 0 : i32
    return %arg0, %c0_i32 : i32, i32
  }
  func.func @transform_1(%arg0: i32, %arg1: i32) -> (i32, i32) {
    %c0_i32 = arith.constant 0 : i32
    %c0_i32_0 = arith.constant 0 : i32
    return %c0_i32, %arg1 : i32, i32
  }
  func.func @transform_2(%arg0: i32, %arg1: i32) -> (i32, i32) {
    %c0_i32 = arith.constant 0 : i32
    %c0_i32_0 = arith.constant 0 : i32
    return %c0_i32, %arg1 : i32, i32
  }
  func.func @transform_3(%arg0: i32, %arg1: i32) -> (i32, i32) {
    %c0_i32 = arith.constant 0 : i32
    %c0_i32_0 = arith.constant 0 : i32
    return %arg1, %c0_i32 : i32, i32
  }
  func.func @transform_4(%arg0: i32, %arg1: i32) -> (i32, i32) {
    %c0_i32 = arith.constant 0 : i32
    %c0_i32_0 = arith.constant 0 : i32
    %c0_i32_1 = arith.constant 0 : i32
    return %c0_i32, %c0_i32_0 : i32, i32
  }
  func.func @transform_5(%arg0: i32, %arg1: i32) -> (i32, i32) {
    %c0_i32 = arith.constant 0 : i32
    %c0_i32_0 = arith.constant 0 : i32
    return %arg0, %c0_i32 : i32, i32
  }
}

</mosaic_0001>

<llo_original>
// kernel: tpu_custom_call.1
$region0: #{tpu_custom_call.1}
  #allocation0 [shape = 'u32[]', space=smem, size = 0x4, offset = 0x4, fixed_abs, tag = 'smem constant byte address 0x4 - core index']
  #allocation1 [shape = 'u32[72,128]{1,0:T(1,128)}', space=vmem, size = 0x9000, scoped, tag = 'internal scratch']
  #allocation2 [shape = 'f32[16,384]{1,0:T(8,128)}', space=vmem, size = 0x6000, scoped, tag = 'scratch operand']
  %s0 = inlined_call_operand.hbm [shape: f32[32,384], index: 0, kind: input, shape index: {}]
  %s1 = inlined_call_operand.hbm [shape: bf16[384,1536], index: 1, kind: input, shape index: {}]
  %s2 = inlined_call_operand.hbm [shape: f32[1,1536], index: 2, kind: input, shape index: {}]
  %s3 = inlined_call_operand.hbm [shape: bf16[1536,384], index: 3, kind: input, shape index: {}]
  %s4 = inlined_call_operand.hbm [shape: f32[1,384], index: 4, kind: input, shape index: {}]
  %s5 = inlined_call_operand.hbm [shape: f32[32,384], index: 5, kind: output, shape index: {}]
  %s6 = sld [smem:[#allocation0]]
  $region81: #{tpu_custom_call.1} parent=0
    _
  %s8 = ssub.s32 1, %s6
  %s9 = scalar_select 0, %s8, %s6
  $region1: #{tpu_custom_call.1} parent=0
    #allocation3 [shape = 'u8[49152]{0}', space=vmem, size = 0xc000, scoped, tag = 'input window, operand 0']
    #allocation4 [shape = 's32[2]{0}', space=sflag, size = 0x8, scoped, tag = 'scoped memory for tpu_custom_call.1']
    #allocation5 [shape = 's32[2]{0}', space=sflag, size = 0x8, scoped, tag = 'scoped memory for tpu_custom_call.1']
    #allocation6 [shape = 'u8[786432]{0}', space=vmem, size = 0xc0000, scoped, tag = 'input window, operand 1']
    #allocation7 [shape = 's32[2]{0}', space=sflag, size = 0x8, scoped, tag = 'scoped memory for tpu_custom_call.1']
    #allocation8 [shape = 'u8[4096]{0}', space=vmem, size = 0x1000, scoped, tag = 'input window, operand 2']
    #allocation9 [shape = 'u8[786432]{0}', space=vmem, size = 0xc0000, scoped, tag = 'input window, operand 3']
    #allocation10 [shape = 's32[2]{0}', space=sflag, size = 0x8, scoped, tag = 'scoped memory for tpu_custom_call.1']
    #allocation11 [shape = 'u8[1536]{0}', space=vmem, size = 0x800, scoped, tag = 'input window, operand 4, single buffered']
    #allocation12 [shape = 'u8[49152]{0}', space=vmem, size = 0xc000, scoped, tag = 'output window, operand 0']
    %10 = vsyncpa [#allocation4], 0
    %s11 = scalar_lea.sflag [#allocation4], 1
    %12 = vsyncpa %s11, 0
    %13 = vsyncpa [#allocation7], 0
    %s14 = scalar_lea.sflag [#allocation7], 1
    %15 = vsyncpa %s14, 0
    %16 = vsyncpa [#allocation10], 0
    %s17 = scalar_lea.sflag [#allocation10], 1
    %18 = vsyncpa %s17, 0
    %19 = vsyncpa [#allocation5], 0
    %s20 = scalar_lea.sflag [#allocation5], 1
    %21 = vsyncpa %s20, 0
    loop: start=0, step=1, limit=8
    $region2: #{tpu_custom_call.1} parent=1 // loop_pre_header
      _
    $region3: #{tpu_custom_call.1} parent=1 // loop_header
      %s23 = sphi 0, %s27
      %p24 = scmp.ge.s32.totalorder %s23, 8
      %s30 = sphi 0, %s42
      %s31 = sphi 0, %s38
      %s32 = sphi 0, %s30
      %s33 = sphi 0, %s31
      %s34 = sphi 0, %s32
      %s35 = sphi 0, %s33
      %s45 = sphi 0, %s47
      %s48 = sphi 0, %s45
      %s49 = sphi 0, %s48
      %s65 = sphi 0, %s49
      %s71 = sphi 0, %s73
      %s74 = sphi 0, %s71
      %s75 = sphi 0, %s74
      %s91 = sphi 0, %s75
      %s97 = sphi 0, %s99
      %s100 = sphi 0, %s97
      %s101 = sphi 0, %s100
      %s117 = sphi 0, %s101
      %s123 = sphi 0, %s125
      %s126 = sphi 0, %s123
      %s127 = sphi 0, %s126
      %s143 = sphi 0, %s127
      %s147 = sphi 0, %s147
      %s149 = sphi 0, %s147
      %s150 = sphi 0, %s149
      %s164 = sphi 0, %s150
      %s170 = sphi 0, %s172
      %s173 = sphi 0, %s170
      %s174 = sphi 0, %s173
      %s190 = sphi 0, %s174
    $region4: #{tpu_custom_call.1} parent=1 // loop_header_branch
      %26 = sbr.rel (%p24) target = $region8
    $region5: #{tpu_custom_call.1} parent=1 // loop_body
      %s28 = ssub.s32 %s23, 1
      %s29 = ssub.s32 %s23, 2
      %s36 = sadd.s32 1, %s31
      %p37 = scmp.ge.s32.totalorder %s36, 3
      %s38 = scalar_select %p37, 0, %s36
      %s39 = sadd.s32 1, %s30
      %s40 = scalar_select %p37, %s39, %s30
      %p41 = scmp.ge.s32.totalorder %s40, 2
      %s42 = scalar_select %p41, 0, %s40
      %s43 = ssub.s32 %s30, %s42
      %p44 = scmp.eq.s32.totalorder %s43, 0
      %s46 = sadd.s32 %s45, 1
      %s47 = scalar_select %p44, %s45, %s46
      %p50 = pneg %p44
      %p51 = scmp.eq.s32.totalorder %s23, 5
      %p52 = por %p50, %p51
      %p53 = scmp.ne.s32.totalorder %s45, %s48
      %p54 = scmp.eq.s32.totalorder %s23, 0
      %p55 = por %p53, %p54
      %p56 = scmp.ne.s32.totalorder %s45, %s48
      %p57 = scmp.eq.s32.totalorder %s28, 5
      %p58 = por %p56, %p57
      %p59 = scmp.ne.s32.totalorder %s48, %s49
      %p60 = scmp.eq.s32.totalorder %s28, 0
      %p61 = por %p59, %p60
      %p62 = scmp.ne.s32.totalorder %s48, %s49
      %p63 = scmp.eq.s32.totalorder %s29, 5
      %p64 = por %p62, %p63
      %p66 = scmp.ne.s32.totalorder %s49, %s65
      %p67 = scmp.eq.s32.totalorder %s29, 0
      %p68 = por %p66, %p67
      %s69 = ssub.s32 %s31, %s38
      %p70 = scmp.eq.s32.totalorder %s69, 0
      %s72 = sadd.s32 %s71, 1
      %s73 = scalar_select %p70, %s71, %s72
      %p76 = pneg %p70
      %p77 = scmp.eq.s32.totalorder %s23, 5
      %p78 = por %p76, %p77
      %p79 = scmp.ne.s32.totalorder %s71, %s74
      %p80 = scmp.eq.s32.totalorder %s23, 0
      %p81 = por %p79, %p80
      %p82 = scmp.ne.s32.totalorder %s71, %s74
      %p83 = scmp.eq.s32.totalorder %s28, 5
      %p84 = por %p82, %p83
      %p85 = scmp.ne.s32.totalorder %s74, %s75
      %p86 = scmp.eq.s32.totalorder %s28, 0
      %p87 = por %p85, %p86
      %p88 = scmp.ne.s32.totalorder %s74, %s75
      %p89 = scmp.eq.s32.totalorder %s29, 5
      %p90 = por %p88, %p89
      %p92 = scmp.ne.s32.totalorder %s75, %s91
      %p93 = scmp.eq.s32.totalorder %s29, 0
      %p94 = por %p92, %p93
      %s95 = ssub.s32 %s31, %s38
      %p96 = scmp.eq.s32.totalorder %s95, 0
      %s98 = sadd.s32 %s97, 1
      %s99 = scalar_select %p96, %s97, %s98
      %p102 = pneg %p96
      %p103 = scmp.eq.s32.totalorder %s23, 5
      %p104 = por %p102, %p103
      %p105 = scmp.ne.s32.totalorder %s97, %s100
      %p106 = scmp.eq.s32.totalorder %s23, 0
      %p107 = por %p105, %p106
      %p108 = scmp.ne.s32.totalorder %s97, %s100
      %p109 = scmp.eq.s32.totalorder %s28, 5
      %p110 = por %p108, %p109
      %p111 = scmp.ne.s32.totalorder %s100, %s101
      %p112 = scmp.eq.s32.totalorder %s28, 0
      %p113 = por %p111, %p112
      %p114 = scmp.ne.s32.totalorder %s100, %s101
      %p115 = scmp.eq.s32.totalorder %s29, 5
      %p116 = por %p114, %p115
      %p118 = scmp.ne.s32.totalorder %s101, %s117
      %p119 = scmp.eq.s32.totalorder %s29, 0
      %p120 = por %p118, %p119
      %s121 = ssub.s32 %s31, %s38
      %p122 = scmp.eq.s32.totalorder %s121, 0
      %s124 = sadd.s32 %s123, 1
      %s125 = scalar_select %p122, %s123, %s124
      %p128 = pneg %p122
      %p129 = scmp.eq.s32.totalorder %s23, 5
      %p130 = por %p128, %p129
      %p131 = scmp.ne.s32.totalorder %s123, %s126
      %p132 = scmp.eq.s32.totalorder %s23, 0
      %p133 = por %p131, %p132
      %p134 = scmp.ne.s32.totalorder %s123, %s126
      %p135 = scmp.eq.s32.totalorder %s28, 5
      %p136 = por %p134, %p135
      %p137 = scmp.ne.s32.totalorder %s126, %s127
      %p138 = scmp.eq.s32.totalorder %s28, 0
      %p139 = por %p137, %p138
      %p140 = scmp.ne.s32.totalorder %s126, %s127
      %p141 = scmp.eq.s32.totalorder %s29, 5
      %p142 = por %p140, %p141
      %p144 = scmp.ne.s32.totalorder %s127, %s143
      %p145 = scmp.eq.s32.totalorder %s29, 0
      %p146 = por %p144, %p145
      %s148 = sadd.s32 %s147, 1
      %p151 = scmp.eq.s32.totalorder %s23, 5
      %p152 = scmp.ne.s32.totalorder %s147, %s149
      %p153 = scmp.eq.s32.totalorder %s23, 0
      %p154 = por %p152, %p153
      %p155 = scmp.ne.s32.totalorder %s147, %s149
      %p156 = scmp.eq.s32.totalorder %s28, 5
      %p157 = por %p155, %p156
      %p158 = scmp.ne.s32.totalorder %s149, %s150
      %p159 = scmp.eq.s32.totalorder %s28, 0
      %p160 = por %p158, %p159
      %p161 = scmp.ne.s32.totalorder %s149, %s150
      %p162 = scmp.eq.s32.totalorder %s29, 5
      %p163 = por %p161, %p162
      %p165 = scmp.ne.s32.totalorder %s150, %s164
      %p166 = scmp.eq.s32.totalorder %s29, 0
      %p167 = por %p165, %p166
      %s168 = ssub.s32 %s30, %s42
      %p169 = scmp.eq.s32.totalorder %s168, 0
      %s171 = sadd.s32 %s170, 1
      %s172 = scalar_select %p169, %s170, %s171
      %p175 = pneg %p169
      %p176 = scmp.eq.s32.totalorder %s23, 5
      %p177 = por %p175, %p176
      %p178 = scmp.ne.s32.totalorder %s170, %s173
      %p179 = scmp.eq.s32.totalorder %s23, 0
      %p180 = por %p178, %p179
      %p181 = scmp.ne.s32.totalorder %s170, %s173
      %p182 = scmp.eq.s32.totalorder %s28, 5
      %p183 = por %p181, %p182
      %p184 = scmp.ne.s32.totalorder %s173, %s174
      %p185 = scmp.eq.s32.totalorder %s28, 0
      %p186 = por %p184, %p185
      %p187 = scmp.ne.s32.totalorder %s173, %s174
      %p188 = scmp.eq.s32.totalorder %s29, 5
      %p189 = por %p187, %p188
      %p191 = scmp.ne.s32.totalorder %s174, %s190
      %p192 = scmp.eq.s32.totalorder %s29, 0
      %p193 = por %p191, %p192
      %p194 = scmp.le.s32.totalorder 1, %s23
      %p195 = scmp.lt.s32.totalorder %s23, 7
      %p196 = pnand %p194, %p195
      %p197 = pneg %p196
      // Predicated region
      $region9: #{tpu_custom_call.1} parent=5 // pred_check
        _
      $region10: #{tpu_custom_call.1} parent=5 // pred_check_branch
        %199 = sbr.rel (%p196) target = $region12
      $region11: #{tpu_custom_call.1} parent=5 // pred_region
        %s200 = ssub.s32 %s23, 1
        // Predicated region
        $region13: #{tpu_custom_call.1} parent=11 // pred_check
          %p201 = pneg %p160
        $region14: #{tpu_custom_call.1} parent=11 // pred_check_branch
          %203 = sbr.rel (%p201) target = $region16
        $region15: #{tpu_custom_call.1} parent=11 // pred_region
          %205 = vsyncadd [#allocation10], 0
          %s207 = sshll.u32 %s4, 4
          %s208 = int_to_ptr.hbm [resolvable:$true] %s207
          %s209 = sshll.u32 [#allocation11], 4
          %s210 = int_to_ptr.vmem [resolvable:$true] %s209
          %212 = dma.hbm_to_vmem [thread:$0]  %s208, 48, %s210, [#allocation10]
        $region16: #{tpu_custom_call.1} parent=11 // pred_fallthru
          _
      $region12: #{tpu_custom_call.1} parent=5 // pred_fallthru
        _
      %p213 = scmp.lt.s32.totalorder %s23, 6
      // Predicated region
      $region17: #{tpu_custom_call.1} parent=5 // pred_check
        %p214 = pneg %p213
      $region18: #{tpu_custom_call.1} parent=5 // pred_check_branch
        %216 = sbr.rel (%p214) target = $region20
      $region19: #{tpu_custom_call.1} parent=5 // pred_region
        // Predicated region
        $region21: #{tpu_custom_call.1} parent=19 // pred_check
          %p217 = pneg %p55
        $region22: #{tpu_custom_call.1} parent=19 // pred_check_branch
          %219 = sbr.rel (%p217) target = $region24
        $region23: #{tpu_custom_call.1} parent=19 // pred_region
          %s220 = sand.u32 %s45, 1
          %s221 = scalar_lea.sflag [#allocation4], %s220
          %s222 = sand.u32 %s45, 1
          %s223 = smul.addr %s222, 48
          %s224 = scalar_lea.vmem [#allocation3], %s223
          %s225 = smul.u32 2, %s30
          %227 = vsyncadd %s221, 0
          %s228 = smul.addr %s225, 3
          %s229 = smul.addr %s228, 8
          %s230 = scalar_lea.hbm %s0, %s229
          %s231 = sshll.u32 %s230, 4
          %s232 = int_to_ptr.hbm [resolvable:$true] %s231
          %s233 = sshll.u32 %s224, 4
          %s234 = int_to_ptr.vmem [resolvable:$true] %s233
          %239 = dma.hbm_to_vmem [thread:$0]  %s232, 768, %s234, %s221, 384, 384, 24
        $region24: #{tpu_custom_call.1} parent=19 // pred_fallthru
          _
        // Predicated region
        $region25: #{tpu_custom_call.1} parent=19 // pred_check
          %p240 = pneg %p81
        $region26: #{tpu_custom_call.1} parent=19 // pred_check_branch
          %242 = sbr.rel (%p240) target = $region28
        $region27: #{tpu_custom_call.1} parent=19 // pred_region
          %s243 = sand.u32 %s23, 1
          %s244 = scalar_lea.sflag [#allocation7], %s243
          %s245 = sand.u32 %s71, 1
          %s246 = smul.addr %s245, 768
          %s247 = scalar_lea.vmem [#allocation6], %s246
          %s248 = smul.u32 4, %s31
          %250 = vsyncadd %s244, 0
          %s251 = smul.addr %s248, 4
          %s252 = scalar_lea.hbm %s1, %s251
          %s253 = sshll.u32 %s252, 4
          %s254 = int_to_ptr.hbm [resolvable:$true] %s253
          %s255 = sshll.u32 %s247, 4
          %s256 = int_to_ptr.vmem [resolvable:$true] %s255
          %261 = dma.hbm_to_vmem [thread:$0]  %s254, 12288, %s256, %s244, 768, 256, 16
        $region28: #{tpu_custom_call.1} parent=19 // pred_fallthru
          _
        // Predicated region
        $region29: #{tpu_custom_call.1} parent=19 // pred_check
          %p262 = pneg %p107
        $region30: #{tpu_custom_call.1} parent=19 // pred_check_branch
          %264 = sbr.rel (%p262) target = $region32
        $region31: #{tpu_custom_call.1} parent=19 // pred_region
          %s265 = sand.u32 %s23, 1
          %s266 = scalar_lea.sflag [#allocation7], %s265
          %s267 = sand.u32 %s97, 1
          %s268 = smul.addr %s267, 4
          %s269 = scalar_lea.vmem [#allocation8], %s268
          %s270 = smul.u32 4, %s31
          %272 = vsyncadd %s266, 0
          %s273 = scalar_lea.hbm %s2, %s270
          %s275 = sshll.u32 %s273, 4
          %s276 = int_to_ptr.hbm [resolvable:$true] %s275
          %s277 = sshll.u32 %s269, 4
          %s278 = int_to_ptr.vmem [resolvable:$true] %s277
          %280 = dma.hbm_to_vmem [thread:$0]  %s276, 64, %s278, %s266
        $region32: #{tpu_custom_call.1} parent=19 // pred_fallthru
          _
        // Predicated region
        $region33: #{tpu_custom_call.1} parent=19 // pred_check
          %p281 = pneg %p133
        $region34: #{tpu_custom_call.1} parent=19 // pred_check_branch
          %283 = sbr.rel (%p281) target = $region36
        $region35: #{tpu_custom_call.1} parent=19 // pred_region
          %s284 = sand.u32 %s23, 1
          %s285 = scalar_lea.sflag [#allocation10], %s284
          %s286 = sand.u32 %s123, 1
          %s287 = smul.addr %s286, 768
          %s288 = scalar_lea.vmem [#allocation9], %s287
          %s289 = smul.u32 64, %s31
          %291 = vsyncadd %s285, 0
          %s292 = smul.addr %s289, 3
          %s293 = smul.addr %s292, 4
          %s294 = scalar_lea.hbm %s3, %s293
          %s295 = sshll.u32 %s294, 4
          %s296 = int_to_ptr.hbm [resolvable:$true] %s295
          %s297 = sshll.u32 %s288, 4
          %s298 = int_to_ptr.vmem [resolvable:$true] %s297
          %303 = dma.hbm_to_vmem [thread:$0]  %s296, 12288, %s298, %s285, 192, 192, 12
        $region36: #{tpu_custom_call.1} parent=19 // pred_fallthru
          _
      $region20: #{tpu_custom_call.1} parent=5 // pred_fallthru
        _
      %p304 = scmp.le.s32.totalorder 1, %s23
      %p305 = scmp.lt.s32.totalorder %s23, 7
      %p306 = pnand %p304, %p305
      %p307 = pneg %p306
      // Predicated region
      $region37: #{tpu_custom_call.1} parent=5 // pred_check
        _
      $region38: #{tpu_custom_call.1} parent=5 // pred_check_branch
        %309 = sbr.rel (%p306) target = $region40
      $region39: #{tpu_custom_call.1} parent=5 // pred_region
        %s310 = ssub.s32 %s23, 1
        %s311 = sand.u32 %s48, 1
        %s312 = scalar_lea.sflag [#allocation4], %s311
        %s313 = sand.u32 %s48, 1
        %s314 = smul.addr %s313, 48
        %s315 = scalar_lea.vmem [#allocation3], %s314
        // Predicated region
        $region41: #{tpu_custom_call.1} parent=39 // pred_check
          %p316 = pneg %p61
        $region42: #{tpu_custom_call.1} parent=39 // pred_check_branch
          %318 = sbr.rel (%p316) target = $region44
        $region43: #{tpu_custom_call.1} parent=39 // pred_region
          %320 = dma.done %s312, 768
        $region44: #{tpu_custom_call.1} parent=39 // pred_fallthru
          _
        %s321 = sand.u32 %s28, 1
        %s322 = scalar_lea.sflag [#allocation7], %s321
        %s323 = sand.u32 %s74, 1
        %s324 = smul.addr %s323, 768
        %s325 = scalar_lea.vmem [#allocation6], %s324
        // Predicated region
        $region45: #{tpu_custom_call.1} parent=39 // pred_check
          %p326 = pneg %p87
        $region46: #{tpu_custom_call.1} parent=39 // pred_check_branch
          %328 = sbr.rel (%p326) target = $region48
        $region47: #{tpu_custom_call.1} parent=39 // pred_region
          %330 = dma.done %s322, 12288
        $region48: #{tpu_custom_call.1} parent=39 // pred_fallthru
          _
        %s331 = sand.u32 %s28, 1
        %s332 = scalar_lea.sflag [#allocation7], %s331
        %s333 = sand.u32 %s100, 1
        %s334 = smul.addr %s333, 4
        %s335 = scalar_lea.vmem [#allocation8], %s334
        // Predicated region
        $region49: #{tpu_custom_call.1} parent=39 // pred_check
          %p336 = pneg %p113
        $region50: #{tpu_custom_call.1} parent=39 // pred_check_branch
          %338 = sbr.rel (%p336) target = $region52
        $region51: #{tpu_custom_call.1} parent=39 // pred_region
          %340 = dma.done %s332, 64
        $region52: #{tpu_custom_call.1} parent=39 // pred_fallthru
          _
        %s341 = sand.u32 %s28, 1
        %s342 = scalar_lea.sflag [#allocation10], %s341
        %s343 = sand.u32 %s126, 1
        %s344 = smul.addr %s343, 768
        %s345 = scalar_lea.vmem [#allocation9], %s344
        // Predicated region
        $region53: #{tpu_custom_call.1} parent=39 // pred_check
          %p346 = pneg %p139
        $region54: #{tpu_custom_call.1} parent=39 // pred_check_branch
          %348 = sbr.rel (%p346) target = $region56
        $region55: #{tpu_custom_call.1} parent=39 // pred_region
          %350 = dma.done %s342, 12288
        $region56: #{tpu_custom_call.1} parent=39 // pred_fallthru
          _
        // Predicated region
        $region57: #{tpu_custom_call.1} parent=39 // pred_check
          %p351 = pneg %p160
        $region58: #{tpu_custom_call.1} parent=39 // pred_check_branch
          %353 = sbr.rel (%p351) target = $region60
        $region59: #{tpu_custom_call.1} parent=39 // pred_region
          %355 = dma.done [#allocation10], 48
        $region60: #{tpu_custom_call.1} parent=39 // pred_fallthru
          _
        %s356 = sand.u32 %s48, 1
        %s357 = scalar_lea.sflag [#allocation4], %s356
        %s358 = sand.u32 %s48, 1
        %s359 = smul.addr %s358, 48
        %s360 = scalar_lea.vmem [#allocation3], %s359
        %p361 = pneg %p61
        %p362 = pneg %p58
        %s363 = sand.u32 %s28, 1
        %s364 = scalar_lea.sflag [#allocation7], %s363
        %s365 = sand.u32 %s74, 1
        %s366 = smul.addr %s365, 768
        %s367 = scalar_lea.vmem [#allocation6], %s366
        %p368 = pneg %p87
        %p369 = pneg %p84
        %s370 = sand.u32 %s28, 1
        %s371 = scalar_lea.sflag [#allocation7], %s370
        %s372 = sand.u32 %s100, 1
        %s373 = smul.addr %s372, 4
        %s374 = scalar_lea.vmem [#allocation8], %s373
        %p375 = pneg %p113
        %p376 = pneg %p110
        %s377 = sand.u32 %s28, 1
        %s378 = scalar_lea.sflag [#allocation10], %s377
        %s379 = sand.u32 %s126, 1
        %s380 = smul.addr %s379, 768
        %s381 = scalar_lea.vmem [#allocation9], %s380
        %p382 = pneg %p139
        %p383 = pneg %p136
        %p384 = pneg %p160
        %p385 = pneg %p157
        %p386 = pneg %p186
        %p387 = pneg %p183
        %s388 = sand.u32 %s173, 1
        %s389 = scalar_lea.sflag [#allocation5], %s388
        %s390 = sand.u32 %s173, 1
        %s391 = smul.addr %s390, 48
        %s392 = scalar_lea.vmem [#allocation12], %s391
        %s393 = smul.u32 2, %s32
        %s394 = smul.u32 4, %s33
        %s395 = smul.u32 4, %s33
        %s396 = smul.u32 64, %s33
        %s397 = smul.u32 2, %s32
        %p398 = scmp.eq.s32.totalorder %s33, 0
        // Predicated region
        $region61: #{tpu_custom_call.1} parent=39 // pred_check
          %p399 = pneg %p398
        $region62: #{tpu_custom_call.1} parent=39 // pred_check_branch
          %401 = sbr.rel (%p399) target = $region64
        $region63: #{tpu_custom_call.1} parent=39 // pred_region
          %402 = vst [vmem:[#allocation2] sm:$0xff] 0.0
          %403 = vst [vmem:[#allocation2 + $0x8] sm:$0xff] 0.0
          %404 = vst [vmem:[#allocation2 + $0x10] sm:$0xff] 0.0
          %405 = vst [vmem:[#allocation2 + $0x18] sm:$0xff] 0.0
          %406 = vst [vmem:[#allocation2 + $0x20] sm:$0xff] 0.0
          %407 = vst [vmem:[#allocation2 + $0x28] sm:$0xff] 0.0
        $region64: #{tpu_custom_call.1} parent=39 // pred_fallthru
          _
        %v408 = vld [vmem:[%s315] sm:$0xff]
        %v409 = vld [vmem:[%s315 + $0x8] sm:$0xff]
        %v410 = vld [vmem:[%s315 + $0x10] sm:$0xff]
        %v411 = vld [vmem:[%s315 + $0x18] sm:$0xff]
        %v412 = vld [vmem:[%s315 + $0x20] sm:$0xff]
        %v413 = vld [vmem:[%s315 + $0x28] sm:$0xff]
        %v414 = vpack.c.bf16 %v411, %v408
        %v415 = vpack.c.bf16 %v412, %v409
        %v416 = vpack.c.bf16 %v413, %v410
        %v417 = vld [vmem:[%s325] sm:$0xff]
        %v418 = vld [vmem:[%s325 + $0x8] sm:$0xff]
        %v419 = vld [vmem:[%s325 + $0x10] sm:$0xff]
        %v420 = vld [vmem:[%s325 + $0x18] sm:$0xff]
        %v421 = vld [vmem:[%s325 + $0x20] sm:$0xff]
        %v422 = vld [vmem:[%s325 + $0x28] sm:$0xff]
        %v423 = vld [vmem:[%s325 + $0x30] sm:$0xff]
        %v424 = vld [vmem:[%s325 + $0x38] sm:$0xff]
        %v425 = vld [vmem:[%s325 + $0x40] sm:$0xff]
        %v426 = vld [vmem:[%s325 + $0x48] sm:$0xff]
        %v427 = vld [vmem:[%s325 + $0x50] sm:$0xff]
        %v428 = vld [vmem:[%s325 + $0x58] sm:$0xff]
        %v429 = vld [vmem:[%s325 + $0x60] sm:$0xff]
        %v430 = vld [vmem:[%s325 + $0x68] sm:$0xff]
        %v431 = vld [vmem:[%s325 + $0x70] sm:$0xff]
        %v432 = vld [vmem:[%s325 + $0x78] sm:$0xff]
        %v433 = vld [vmem:[%s325 + $0x80] sm:$0xff]
        %v434 = vld [vmem:[%s325 + $0x88] sm:$0xff]
        %v435 = vld [vmem:[%s325 + $0x90] sm:$0xff]
        %v436 = vld [vmem:[%s325 + $0x98] sm:$0xff]
        %v437 = vld [vmem:[%s325 + $0xa0] sm:$0xff]
        %v438 = vld [vmem:[%s325 + $0xa8] sm:$0xff]
        %v439 = vld [vmem:[%s325 + $0xb0] sm:$0xff]
        %v440 = vld [vmem:[%s325 + $0xb8] sm:$0xff]
        %v441 = vld [vmem:[%s325 + $0xc0] sm:$0xff]
        %v442 = vld [vmem:[%s325 + $0xc8] sm:$0xff]
        %v443 = vld [vmem:[%s325 + $0xd0] sm:$0xff]
        %v444 = vld [vmem:[%s325 + $0xd8] sm:$0xff]
        %v445 = vld [vmem:[%s325 + $0xe0] sm:$0xff]
        %v446 = vld [vmem:[%s325 + $0xe8] sm:$0xff]
        %v447 = vld [vmem:[%s325 + $0xf0] sm:$0xff]
        %v448 = vld [vmem:[%s325 + $0xf8] sm:$0xff]
        %v449 = vld [vmem:[%s325 + $0x100] sm:$0xff]
        %v450 = vld [vmem:[%s325 + $0x108] sm:$0xff]
        %v451 = vld [vmem:[%s325 + $0x110] sm:$0xff]
        %v452 = vld [vmem:[%s325 + $0x118] sm:$0xff]
        %v453 = vld [vmem:[%s325 + $0x120] sm:$0xff]
        %v454 = vld [vmem:[%s325 + $0x128] sm:$0xff]
        %v455 = vld [vmem:[%s325 + $0x130] sm:$0xff]
        %v456 = vld [vmem:[%s325 + $0x138] sm:$0xff]
        %v457 = vld [vmem:[%s325 + $0x140] sm:$0xff]
        %v458 = vld [vmem:[%s325 + $0x148] sm:$0xff]
        %v459 = vld [vmem:[%s325 + $0x150] sm:$0xff]
        %v460 = vld [vmem:[%s325 + $0x158] sm:$0xff]
        %v461 = vld [vmem:[%s325 + $0x160] sm:$0xff]
        %v462 = vld [vmem:[%s325 + $0x168] sm:$0xff]
        %v463 = vld [vmem:[%s325 + $0x170] sm:$0xff]
        %v464 = vld [vmem:[%s325 + $0x178] sm:$0xff]
        %v465 = vld [vmem:[%s325 + $0x180] sm:$0xff]
        %v466 = vld [vmem:[%s325 + $0x188] sm:$0xff]
        %v467 = vld [vmem:[%s325 + $0x190] sm:$0xff]
        %v468 = vld [vmem:[%s325 + $0x198] sm:$0xff]
        %v469 = vld [vmem:[%s325 + $0x1a0] sm:$0xff]
        %v470 = vld [vmem:[%s325 + $0x1a8] sm:$0xff]
        %v471 = vld [vmem:[%s325 + $0x1b0] sm:$0xff]
        %v472 = vld [vmem:[%s325 + $0x1b8] sm:$0xff]
        %v473 = vld [vmem:[%s325 + $0x1c0] sm:$0xff]
        %v474 = vld [vmem:[%s325 + $0x1c8] sm:$0xff]
        %v475 = vld [vmem:[%s325 + $0x1d0] sm:$0xff]
        %v476 = vld [vmem:[%s325 + $0x1d8] sm:$0xff]
        %v477 = vld [vmem:[%s325 + $0x1e0] sm:$0xff]
        %v478 = vld [vmem:[%s325 + $0x1e8] sm:$0xff]
        %v479 = vld [vmem:[%s325 + $0x1f0] sm:$0xff]
        %v480 = vld [vmem:[%s325 + $0x1f8] sm:$0xff]
        %v481 = vld [vmem:[%s325 + $0x200] sm:$0xff]
        %v482 = vld [vmem:[%s325 + $0x208] sm:$0xff]
        %v483 = vld [vmem:[%s325 + $0x210] sm:$0xff]
        %v484 = vld [vmem:[%s325 + $0x218] sm:$0xff]
        %v485 = vld [vmem:[%s325 + $0x220] sm:$0xff]
        %v486 = vld [vmem:[%s325 + $0x228] sm:$0xff]
        %v487 = vld [vmem:[%s325 + $0x230] sm:$0xff]
        %v488 = vld [vmem:[%s325 + $0x238] sm:$0xff]
        %v489 = vld [vmem:[%s325 + $0x240] sm:$0xff]
        %v490 = vld [vmem:[%s325 + $0x248] sm:$0xff]
        %v491 = vld [vmem:[%s325 + $0x250] sm:$0xff]
        %v492 = vld [vmem:[%s325 + $0x258] sm:$0xff]
        %v493 = vld [vmem:[%s325 + $0x260] sm:$0xff]
        %v494 = vld [vmem:[%s325 + $0x268] sm:$0xff]
        %v495 = vld [vmem:[%s325 + $0x270] sm:$0xff]
        %v496 = vld [vmem:[%s325 + $0x278] sm:$0xff]
        %v497 = vld [vmem:[%s325 + $0x280] sm:$0xff]
        %v498 = vld [vmem:[%s325 + $0x288] sm:$0xff]
        %v499 = vld [vmem:[%s325 + $0x290] sm:$0xff]
        %v500 = vld [vmem:[%s325 + $0x298] sm:$0xff]
        %v501 = vld [vmem:[%s325 + $0x2a0] sm:$0xff]
        %v502 = vld [vmem:[%s325 + $0x2a8] sm:$0xff]
        %v503 = vld [vmem:[%s325 + $0x2b0] sm:$0xff]
        %v504 = vld [vmem:[%s325 + $0x2b8] sm:$0xff]
        %v505 = vld [vmem:[%s325 + $0x2c0] sm:$0xff]
        %v506 = vld [vmem:[%s325 + $0x2c8] sm:$0xff]
        %v507 = vld [vmem:[%s325 + $0x2d0] sm:$0xff]
        %v508 = vld [vmem:[%s325 + $0x2d8] sm:$0xff]
        %v509 = vld [vmem:[%s325 + $0x2e0] sm:$0xff]
        %v510 = vld [vmem:[%s325 + $0x2e8] sm:$0xff]
        %v511 = vld [vmem:[%s325 + $0x2f0] sm:$0xff]
        %v512 = vld [vmem:[%s325 + $0x2f8] sm:$0xff]
        %v513 = vld [vmem:[%s335] sm:$0xf]
        %v515 = vperm.slane %v513, 0
        %v516 = vperm.slane %v513, 1
        %v517 = vperm.slane %v513, 2
        %v518 = vperm.slane %v513, 3
        %v619 = vunpack.c.l.b16 %v417
        %v620 = vunpack.c.h.b16 %v417
        %v621 = vunpack.c.l.b16 %v418
        %v622 = vunpack.c.h.b16 %v418
        %v623 = vunpack.c.l.b16 %v419
        %v624 = vunpack.c.h.b16 %v419
        %v625 = vunpack.c.l.b16 %v420
        %v626 = vunpack.c.h.b16 %v420
        %v627 = vunpack.c.l.b16 %v421
        %v628 = vunpack.c.h.b16 %v421
        %v629 = vunpack.c.l.b16 %v422
        %v630 = vunpack.c.h.b16 %v422
        %v631 = vunpack.c.l.b16 %v423
        %v632 = vunpack.c.h.b16 %v423
        %v633 = vunpack.c.l.b16 %v424
        %v634 = vunpack.c.h.b16 %v424
        %v635 = vunpack.c.l.b16 %v425
        %v636 = vunpack.c.h.b16 %v425
        %v637 = vunpack.c.l.b16 %v426
        %v638 = vunpack.c.h.b16 %v426
        %v639 = vunpack.c.l.b16 %v427
        %v640 = vunpack.c.h.b16 %v427
        %v641 = vunpack.c.l.b16 %v428
        %v642 = vunpack.c.h.b16 %v428
        %v643 = vunpack.c.l.b16 %v429
        %v644 = vunpack.c.h.b16 %v429
        %v645 = vunpack.c.l.b16 %v430
        %v646 = vunpack.c.h.b16 %v430
        %v647 = vunpack.c.l.b16 %v431
        %v648 = vunpack.c.h.b16 %v431
        %v649 = vunpack.c.l.b16 %v432
        %v650 = vunpack.c.h.b16 %v432
        %v651 = vunpack.c.l.b16 %v433
        %v652 = vunpack.c.h.b16 %v433
        %v653 = vunpack.c.l.b16 %v434
        %v654 = vunpack.c.h.b16 %v434
        %v655 = vunpack.c.l.b16 %v435
        %v656 = vunpack.c.h.b16 %v435
        %v657 = vunpack.c.l.b16 %v436
        %v658 = vunpack.c.h.b16 %v436
        %v659 = vunpack.c.l.b16 %v437
        %v660 = vunpack.c.h.b16 %v437
        %v661 = vunpack.c.l.b16 %v438
        %v662 = vunpack.c.h.b16 %v438
        %v663 = vunpack.c.l.b16 %v439
        %v664 = vunpack.c.h.b16 %v439
        %v665 = vunpack.c.l.b16 %v440
        %v666 = vunpack.c.h.b16 %v440
        %v667 = vunpack.c.l.b16 %v441
        %v668 = vunpack.c.h.b16 %v441
        %v669 = vunpack.c.l.b16 %v442
        %v670 = vunpack.c.h.b16 %v442
        %v671 = vunpack.c.l.b16 %v443
        %v672 = vunpack.c.h.b16 %v443
        %v673 = vunpack.c.l.b16 %v444
        %v674 = vunpack.c.h.b16 %v444
        %v675 = vunpack.c.l.b16 %v445
        %v676 = vunpack.c.h.b16 %v445
        %v677 = vunpack.c.l.b16 %v446
        %v678 = vunpack.c.h.b16 %v446
        %v679 = vunpack.c.l.b16 %v447
        %v680 = vunpack.c.h.b16 %v447
        %v681 = vunpack.c.l.b16 %v448
        %v682 = vunpack.c.h.b16 %v448
        %v683 = vunpack.c.l.b16 %v449
        %v684 = vunpack.c.h.b16 %v449
        %v685 = vunpack.c.l.b16 %v450
        %v686 = vunpack.c.h.b16 %v450
        %v687 = vunpack.c.l.b16 %v451
        %v688 = vunpack.c.h.b16 %v451
        %v689 = vunpack.c.l.b16 %v452
        %v690 = vunpack.c.h.b16 %v452
        %v691 = vunpack.c.l.b16 %v453
        %v692 = vunpack.c.h.b16 %v453
        %v693 = vunpack.c.l.b16 %v454
        %v694 = vunpack.c.h.b16 %v454
        %v695 = vunpack.c.l.b16 %v455
        %v696 = vunpack.c.h.b16 %v455
        %v697 = vunpack.c.l.b16 %v456
        %v698 = vunpack.c.h.b16 %v456
        %v699 = vunpack.c.l.b16 %v457
        %v700 = vunpack.c.h.b16 %v457
        %v701 = vunpack.c.l.b16 %v458
        %v702 = vunpack.c.h.b16 %v458
        %v703 = vunpack.c.l.b16 %v459
        %v704 = vunpack.c.h.b16 %v459
        %v705 = vunpack.c.l.b16 %v460
        %v706 = vunpack.c.h.b16 %v460
        %v707 = vunpack.c.l.b16 %v461
        %v708 = vunpack.c.h.b16 %v461
        %v709 = vunpack.c.l.b16 %v462
        %v710 = vunpack.c.h.b16 %v462
        %v711 = vunpack.c.l.b16 %v463
        %v712 = vunpack.c.h.b16 %v463
        %v713 = vunpack.c.l.b16 %v464
        %v714 = vunpack.c.h.b16 %v464
        %v715 = vunpack.c.l.b16 %v465
        %v716 = vunpack.c.h.b16 %v465
        %v717 = vunpack.c.l.b16 %v466
        %v718 = vunpack.c.h.b16 %v466
        %v719 = vunpack.c.l.b16 %v467
        %v720 = vunpack.c.h.b16 %v467
        %v721 = vunpack.c.l.b16 %v468
        %v722 = vunpack.c.h.b16 %v468
        %v723 = vunpack.c.l.b16 %v469
        %v724 = vunpack.c.h.b16 %v469
        %v725 = vunpack.c.l.b16 %v470
        %v726 = vunpack.c.h.b16 %v470
        %v727 = vunpack.c.l.b16 %v471
        %v728 = vunpack.c.h.b16 %v471
        %v729 = vunpack.c.l.b16 %v472
        %v730 = vunpack.c.h.b16 %v472
        %v731 = vunpack.c.l.b16 %v473
        %v732 = vunpack.c.h.b16 %v473
        %v733 = vunpack.c.l.b16 %v474
        %v734 = vunpack.c.h.b16 %v474
        %v735 = vunpack.c.l.b16 %v475
        %v736 = vunpack.c.h.b16 %v475
        %v737 = vunpack.c.l.b16 %v476
        %v738 = vunpack.c.h.b16 %v476
        %v739 = vunpack.c.l.b16 %v477
        %v740 = vunpack.c.h.b16 %v477
        %v741 = vunpack.c.l.b16 %v478
        %v742 = vunpack.c.h.b16 %v478
        %v743 = vunpack.c.l.b16 %v479
        %v744 = vunpack.c.h.b16 %v479
        %v745 = vunpack.c.l.b16 %v480
        %v746 = vunpack.c.h.b16 %v480
        %v747 = vunpack.c.l.b16 %v481
        %v748 = vunpack.c.h.b16 %v481
        %v749 = vunpack.c.l.b16 %v482
        %v750 = vunpack.c.h.b16 %v482
        %v751 = vunpack.c.l.b16 %v483
        %v752 = vunpack.c.h.b16 %v483
        %v753 = vunpack.c.l.b16 %v484
        %v754 = vunpack.c.h.b16 %v484
        %v755 = vunpack.c.l.b16 %v485
        %v756 = vunpack.c.h.b16 %v485
        %v757 = vunpack.c.l.b16 %v486
        %v758 = vunpack.c.h.b16 %v486
        %v759 = vunpack.c.l.b16 %v487
        %v760 = vunpack.c.h.b16 %v487
        %v761 = vunpack.c.l.b16 %v488
        %v762 = vunpack.c.h.b16 %v488
        %v763 = vunpack.c.l.b16 %v489
        %v764 = vunpack.c.h.b16 %v489
        %v765 = vunpack.c.l.b16 %v490
        %v766 = vunpack.c.h.b16 %v490
        %v767 = vunpack.c.l.b16 %v491
        %v768 = vunpack.c.h.b16 %v491
        %v769 = vunpack.c.l.b16 %v492
        %v770 = vunpack.c.h.b16 %v492
        %v771 = vunpack.c.l.b16 %v493
        %v772 = vunpack.c.h.b16 %v493
        %v773 = vunpack.c.l.b16 %v494
        %v774 = vunpack.c.h.b16 %v494
        %v775 = vunpack.c.l.b16 %v495
        %v776 = vunpack.c.h.b16 %v495
        %v777 = vunpack.c.l.b16 %v496
        %v778 = vunpack.c.h.b16 %v496
        %v779 = vunpack.c.l.b16 %v497
        %v780 = vunpack.c.h.b16 %v497
        %v781 = vunpack.c.l.b16 %v498
        %v782 = vunpack.c.h.b16 %v498
        %v783 = vunpack.c.l.b16 %v499
        %v784 = vunpack.c.h.b16 %v499
        %v785 = vunpack.c.l.b16 %v500
        %v786 = vunpack.c.h.b16 %v500
        %v787 = vunpack.c.l.b16 %v501
        %v788 = vunpack.c.h.b16 %v501
        %v789 = vunpack.c.l.b16 %v502
        %v790 = vunpack.c.h.b16 %v502
        %v791 = vunpack.c.l.b16 %v503
        %v792 = vunpack.c.h.b16 %v503
        %v793 = vunpack.c.l.b16 %v504
        %v794 = vunpack.c.h.b16 %v504
        %v795 = vunpack.c.l.b16 %v505
        %v796 = vunpack.c.h.b16 %v505
        %v797 = vunpack.c.l.b16 %v506
        %v798 = vunpack.c.h.b16 %v506
        %v799 = vunpack.c.l.b16 %v507
        %v800 = vunpack.c.h.b16 %v507
        %v801 = vunpack.c.l.b16 %v508
        %v802 = vunpack.c.h.b16 %v508
        %v803 = vunpack.c.l.b16 %v509
        %v804 = vunpack.c.h.b16 %v509
        %v805 = vunpack.c.l.b16 %v510
        %v806 = vunpack.c.h.b16 %v510
        %v807 = vunpack.c.l.b16 %v511
        %v808 = vunpack.c.h.b16 %v511
        %v809 = vunpack.c.l.b16 %v512
        %v810 = vunpack.c.h.b16 %v512
        %v811 = vpack.c.b16 %v623, %v619
        %v812 = vpack.c.b16 %v624, %v620
        %v813 = vpack.c.b16 %v625, %v621
        %v814 = vpack.c.b16 %v626, %v622
        %v815 = vpack.c.b16 %v631, %v627
        %v816 = vpack.c.b16 %v632, %v628
        %v817 = vpack.c.b16 %v633, %v629
        %v818 = vpack.c.b16 %v634, %v630
        %v819 = vpack.c.b16 %v639, %v635
        %v820 = vpack.c.b16 %v640, %v636
        %v821 = vpack.c.b16 %v641, %v637
        %v822 = vpack.c.b16 %v642, %v638
        %v823 = vpack.c.b16 %v647, %v643
        %v824 = vpack.c.b16 %v648, %v644
        %v825 = vpack.c.b16 %v649, %v645
        %v826 = vpack.c.b16 %v650, %v646
        %v827 = vpack.c.b16 %v655, %v651
        %v828 = vpack.c.b16 %v656, %v652
        %v829 = vpack.c.b16 %v657, %v653
        %v830 = vpack.c.b16 %v658, %v654
        %v831 = vpack.c.b16 %v663, %v659
        %v832 = vpack.c.b16 %v664, %v660
        %v833 = vpack.c.b16 %v665, %v661
        %v834 = vpack.c.b16 %v666, %v662
        %v835 = vpack.c.b16 %v671, %v667
        %v836 = vpack.c.b16 %v672, %v668
        %v837 = vpack.c.b16 %v673, %v669
        %v838 = vpack.c.b16 %v674, %v670
        %v839 = vpack.c.b16 %v679, %v675
        %v840 = vpack.c.b16 %v680, %v676
        %v841 = vpack.c.b16 %v681, %v677
        %v842 = vpack.c.b16 %v682, %v678
        %v843 = vpack.c.b16 %v687, %v683
        %v844 = vpack.c.b16 %v688, %v684
        %v845 = vpack.c.b16 %v689, %v685
        %v846 = vpack.c.b16 %v690, %v686
        %v847 = vpack.c.b16 %v695, %v691
        %v848 = vpack.c.b16 %v696, %v692
        %v849 = vpack.c.b16 %v697, %v693
        %v850 = vpack.c.b16 %v698, %v694
        %v851 = vpack.c.b16 %v703, %v699
        %v852 = vpack.c.b16 %v704, %v700
        %v853 = vpack.c.b16 %v705, %v701
        %v854 = vpack.c.b16 %v706, %v702
        %v855 = vpack.c.b16 %v711, %v707
        %v856 = vpack.c.b16 %v712, %v708
        %v857 = vpack.c.b16 %v713, %v709
        %v858 = vpack.c.b16 %v714, %v710
        %v859 = vpack.c.b16 %v719, %v715
        %v860 = vpack.c.b16 %v720, %v716
        %v861 = vpack.c.b16 %v721, %v717
        %v862 = vpack.c.b16 %v722, %v718
        %v863 = vpack.c.b16 %v727, %v723
        %v864 = vpack.c.b16 %v728, %v724
        %v865 = vpack.c.b16 %v729, %v725
        %v866 = vpack.c.b16 %v730, %v726
        %v867 = vpack.c.b16 %v735, %v731
        %v868 = vpack.c.b16 %v736, %v732
        %v869 = vpack.c.b16 %v737, %v733
        %v870 = vpack.c.b16 %v738, %v734
        %v871 = vpack.c.b16 %v743, %v739
        %v872 = vpack.c.b16 %v744, %v740
        %v873 = vpack.c.b16 %v745, %v741
        %v874 = vpack.c.b16 %v746, %v742
        %v875 = vpack.c.b16 %v751, %v747
        %v876 = vpack.c.b16 %v752, %v748
        %v877 = vpack.c.b16 %v753, %v749
        %v878 = vpack.c.b16 %v754, %v750
        %v879 = vpack.c.b16 %v759, %v755
        %v880 = vpack.c.b16 %v760, %v756
        %v881 = vpack.c.b16 %v761, %v757
        %v882 = vpack.c.b16 %v762, %v758
        %v883 = vpack.c.b16 %v767, %v763
        %v884 = vpack.c.b16 %v768, %v764
        %v885 = vpack.c.b16 %v769, %v765
        %v886 = vpack.c.b16 %v770, %v766
        %v887 = vpack.c.b16 %v775, %v771
        %v888 = vpack.c.b16 %v776, %v772
        %v889 = vpack.c.b16 %v777, %v773
        %v890 = vpack.c.b16 %v778, %v774
        %v891 = vpack.c.b16 %v783, %v779
        %v892 = vpack.c.b16 %v784, %v780
        %v893 = vpack.c.b16 %v785, %v781
        %v894 = vpack.c.b16 %v786, %v782
        %v895 = vpack.c.b16 %v791, %v787
        %v896 = vpack.c.b16 %v792, %v788
        %v897 = vpack.c.b16 %v793, %v789
        %v898 = vpack.c.b16 %v794, %v790
        %v899 = vpack.c.b16 %v799, %v795
        %v900 = vpack.c.b16 %v800, %v796
        %v901 = vpack.c.b16 %v801, %v797
        %v902 = vpack.c.b16 %v802, %v798
        %v903 = vpack.c.b16 %v807, %v803
        %v904 = vpack.c.b16 %v808, %v804
        %v905 = vpack.c.b16 %v809, %v805
        %v906 = vpack.c.b16 %v810, %v806
        %1003 = vmatpush.bf16.msra.mxu0 %v839
        %1004 = vmatpush.bf16.msra.mxu0 %v835
        %1005 = vmatpush.bf16.msra.mxu0 %v831
        %1006 = vmatpush.bf16.msra.mxu0 %v827
        %1007 = vmatpush.bf16.msra.mxu0 %v823
        %1008 = vmatpush.bf16.msra.mxu0 %v819
        %1009 = vmatpush.bf16.msra.mxu0 %v815
        %1010 = vmatpush.bf16.msra.mxu0 %v811
        %1011 = vmatmul.bf16.gmra.mxu0 %v414
        %v1012 = vpop.f32.mrf.mxu0
        %v1013 = vadd.f32 %v515, %v1012
        %v1014 = vpop.f32.mrf.mxu0
        %v1015 = vadd.f32 %v515, %v1014
        %1016 = vdwg.mxu0
        %1017 = vmatpush.bf16.msra.mxu0 %v871
        %1018 = vmatpush.bf16.msra.mxu0 %v867
        %1019 = vmatpush.bf16.msra.mxu0 %v863
        %1020 = vmatpush.bf16.msra.mxu0 %v859
        %1021 = vmatpush.bf16.msra.mxu0 %v855
        %1022 = vmatpush.bf16.msra.mxu0 %v851
        %1023 = vmatpush.bf16.msra.mxu0 %v847
        %1024 = vmatpush.bf16.msra.mxu0 %v843
        %1025 = vmatmul.bf16.gmra.mxu0 %v415
        %v1026 = vpop.f32.mrf.mxu0
        %v1027 = vadd.f32 %v1013, %v1026
        %v1028 = vpop.f32.mrf.mxu0
        %v1029 = vadd.f32 %v1015, %v1028
        %1030 = vdwg.mxu0
        %1031 = vmatpush.bf16.msra.mxu0 %v903
        %1032 = vmatpush.bf16.msra.mxu0 %v899
        %1033 = vmatpush.bf16.msra.mxu0 %v895
        %1034 = vmatpush.bf16.msra.mxu0 %v891
        %1035 = vmatpush.bf16.msra.mxu0 %v887
        %1036 = vmatpush.bf16.msra.mxu0 %v883
        %1037 = vmatpush.bf16.msra.mxu0 %v879
        %1038 = vmatpush.bf16.msra.mxu0 %v875
        %1039 = vmatmul.bf16.gmra.mxu0 %v416
        %v1040 = vpop.f32.mrf.mxu0
        %v1041 = vadd.f32 %v1027, %v1040
        %v1042 = vpop.f32.mrf.mxu0
        %v1043 = vadd.f32 %v1029, %v1042
        %1044 = vdwg.mxu0
        %1045 = vmatpush.bf16.msra.mxu0 %v840
        %1046 = vmatpush.bf16.msra.mxu0 %v836
        %1047 = vmatpush.bf16.msra.mxu0 %v832
        %1048 = vmatpush.bf16.msra.mxu0 %v828
        %1049 = vmatpush.bf16.msra.mxu0 %v824
        %1050 = vmatpush.bf16.msra.mxu0 %v820
        %1051 = vmatpush.bf16.msra.mxu0 %v816
        %1052 = vmatpush.bf16.msra.mxu0 %v812
        %1053 = vmatmul.bf16.gmra.mxu0 %v414
        %v1054 = vpop.f32.mrf.mxu0
        %v1055 = vadd.f32 %v516, %v1054
        %v1056 = vpop.f32.mrf.mxu0
        %v1057 = vadd.f32 %v516, %v1056
        %1058 = vdwg.mxu0
        %1059 = vmatpush.bf16.msra.mxu0 %v872
        %1060 = vmatpush.bf16.msra.mxu0 %v868
        %1061 = vmatpush.bf16.msra.mxu0 %v864
        %1062 = vmatpush.bf16.msra.mxu0 %v860
        %1063 = vmatpush.bf16.msra.mxu0 %v856
        %1064 = vmatpush.bf16.msra.mxu0 %v852
        %1065 = vmatpush.bf16.msra.mxu0 %v848
        %1066 = vmatpush.bf16.msra.mxu0 %v844
        %1067 = vmatmul.bf16.gmra.mxu0 %v415
        %v1068 = vpop.f32.mrf.mxu0
        %v1069 = vadd.f32 %v1055, %v1068
        %v1070 = vpop.f32.mrf.mxu0
        %v1071 = vadd.f32 %v1057, %v1070
        %1072 = vdwg.mxu0
        %1073 = vmatpush.bf16.msra.mxu0 %v904
        %1074 = vmatpush.bf16.msra.mxu0 %v900
        %1075 = vmatpush.bf16.msra.mxu0 %v896
        %1076 = vmatpush.bf16.msra.mxu0 %v892
        %1077 = vmatpush.bf16.msra.mxu0 %v888
        %1078 = vmatpush.bf16.msra.mxu0 %v884
        %1079 = vmatpush.bf16.msra.mxu0 %v880
        %1080 = vmatpush.bf16.msra.mxu0 %v876
        %1081 = vmatmul.bf16.gmra.mxu0 %v416
        %v1082 = vpop.f32.mrf.mxu0
        %v1083 = vadd.f32 %v1069, %v1082
        %v1084 = vpop.f32.mrf.mxu0
        %v1085 = vadd.f32 %v1071, %v1084
        %1086 = vdwg.mxu0
        %1087 = vmatpush.bf16.msra.mxu0 %v841
        %1088 = vmatpush.bf16.msra.mxu0 %v837
        %1089 = vmatpush.bf16.msra.mxu0 %v833
        %1090 = vmatpush.bf16.msra.mxu0 %v829
        %1091 = vmatpush.bf16.msra.mxu0 %v825
        %1092 = vmatpush.bf16.msra.mxu0 %v821
        %1093 = vmatpush.bf16.msra.mxu0 %v817
        %1094 = vmatpush.bf16.msra.mxu0 %v813
        %1095 = vmatmul.bf16.gmra.mxu0 %v414
        %v1096 = vpop.f32.mrf.mxu0
        %v1097 = vadd.f32 %v517, %v1096
        %v1098 = vpop.f32.mrf.mxu0
        %v1099 = vadd.f32 %v517, %v1098
        %1100 = vdwg.mxu0
        %1101 = vmatpush.bf16.msra.mxu0 %v873
        %1102 = vmatpush.bf16.msra.mxu0 %v869
        %1103 = vmatpush.bf16.msra.mxu0 %v865
        %1104 = vmatpush.bf16.msra.mxu0 %v861
        %1105 = vmatpush.bf16.msra.mxu0 %v857
        %1106 = vmatpush.bf16.msra.mxu0 %v853
        %1107 = vmatpush.bf16.msra.mxu0 %v849
        %1108 = vmatpush.bf16.msra.mxu0 %v845
        %1109 = vmatmul.bf16.gmra.mxu0 %v415
        %v1110 = vpop.f32.mrf.mxu0
        %v1111 = vadd.f32 %v1097, %v1110
        %v1112 = vpop.f32.mrf.mxu0
        %v1113 = vadd.f32 %v1099, %v1112
        %1114 = vdwg.mxu0
        %1115 = vmatpush.bf16.msra.mxu0 %v905
        %1116 = vmatpush.bf16.msra.mxu0 %v901
        %1117 = vmatpush.bf16.msra.mxu0 %v897
        %1118 = vmatpush.bf16.msra.mxu0 %v893
        %1119 = vmatpush.bf16.msra.mxu0 %v889
        %1120 = vmatpush.bf16.msra.mxu0 %v885
        %1121 = vmatpush.bf16.msra.mxu0 %v881
        %1122 = vmatpush.bf16.msra.mxu0 %v877
        %1123 = vmatmul.bf16.gmra.mxu0 %v416
        %v1124 = vpop.f32.mrf.mxu0
        %v1125 = vadd.f32 %v1111, %v1124
        %v1126 = vpop.f32.mrf.mxu0
        %v1127 = vadd.f32 %v1113, %v1126
        %1128 = vdwg.mxu0
        %1129 = vmatpush.bf16.msra.mxu0 %v842
        %1130 = vmatpush.bf16.msra.mxu0 %v838
        %1131 = vmatpush.bf16.msra.mxu0 %v834
        %1132 = vmatpush.bf16.msra.mxu0 %v830
        %1133 = vmatpush.bf16.msra.mxu0 %v826
        %1134 = vmatpush.bf16.msra.mxu0 %v822
        %1135 = vmatpush.bf16.msra.mxu0 %v818
        %1136 = vmatpush.bf16.msra.mxu0 %v814
        %1137 = vmatmul.bf16.gmra.mxu0 %v414
        %v1138 = vpop.f32.mrf.mxu0
        %v1139 = vadd.f32 %v518, %v1138
        %v1140 = vpop.f32.mrf.mxu0
        %v1141 = vadd.f32 %v518, %v1140
        %1142 = vdwg.mxu0
        %1143 = vmatpush.bf16.msra.mxu0 %v874
        %1144 = vmatpush.bf16.msra.mxu0 %v870
        %1145 = vmatpush.bf16.msra.mxu0 %v866
        %1146 = vmatpush.bf16.msra.mxu0 %v862
        %1147 = vmatpush.bf16.msra.mxu0 %v858
        %1148 = vmatpush.bf16.msra.mxu0 %v854
        %1149 = vmatpush.bf16.msra.mxu0 %v850
        %1150 = vmatpush.bf16.msra.mxu0 %v846
        %1151 = vmatmul.bf16.gmra.mxu0 %v415
        %v1152 = vpop.f32.mrf.mxu0
        %v1153 = vadd.f32 %v1139, %v1152
        %v1154 = vpop.f32.mrf.mxu0
        %v1155 = vadd.f32 %v1141, %v1154
        %1156 = vdwg.mxu0
        %1157 = vmatpush.bf16.msra.mxu0 %v906
        %1158 = vmatpush.bf16.msra.mxu0 %v902
        %1159 = vmatpush.bf16.msra.mxu0 %v898
        %1160 = vmatpush.bf16.msra.mxu0 %v894
        %1161 = vmatpush.bf16.msra.mxu0 %v890
        %1162 = vmatpush.bf16.msra.mxu0 %v886
        %1163 = vmatpush.bf16.msra.mxu0 %v882
        %1164 = vmatpush.bf16.msra.mxu0 %v878
        %1165 = vmatmul.bf16.gmra.mxu0 %v416
        %v1166 = vpop.f32.mrf.mxu0
        %v1167 = vadd.f32 %v1153, %v1166
        %v1168 = vpop.f32.mrf.mxu0
        %v1169 = vadd.f32 %v1155, %v1168
        %1170 = vdwg.mxu0
        %v1171 = vmax.f32 %v1041, 0.0
        %v1172 = vmax.f32 %v1083, 0.0
        %v1173 = vmax.f32 %v1125, 0.0
        %v1174 = vmax.f32 %v1167, 0.0
        %v1175 = vmax.f32 %v1043, 0.0
        %v1176 = vmax.f32 %v1085, 0.0
        %v1177 = vmax.f32 %v1127, 0.0
        %v1178 = vmax.f32 %v1169, 0.0
        %v1179 = vld [vmem:[#allocation2] sm:$0xff]
        %v1180 = vld [vmem:[#allocation2 + $0x8] sm:$0xff]
        %v1181 = vld [vmem:[#allocation2 + $0x10] sm:$0xff]
        %v1182 = vld [vmem:[#allocation2 + $0x18] sm:$0xff]
        %v1183 = vld [vmem:[#allocation2 + $0x20] sm:$0xff]
        %v1184 = vld [vmem:[#allocation2 + $0x28] sm:$0xff]
        %v1185 = vpack.c.bf16 %v1175, %v1171
        %v1186 = vpack.c.bf16 %v1176, %v1172
        %v1187 = vpack.c.bf16 %v1177, %v1173
        %v1188 = vpack.c.bf16 %v1178, %v1174
        %v1189 = vld [vmem:[%s345] sm:$0xff]
        %v1190 = vld [vmem:[%s345 + $0x8] sm:$0xf]
        %v1191 = vld [vmem:[%s345 + $0xc] sm:$0xff]
        %v1192 = vld [vmem:[%s345 + $0x14] sm:$0xf]
        %v1193 = vld [vmem:[%s345 + $0x18] sm:$0xff]
        %v1194 = vld [vmem:[%s345 + $0x20] sm:$0xf]
        %v1195 = vld [vmem:[%s345 + $0x24] sm:$0xff]
        %v1196 = vld [vmem:[%s345 + $0x2c] sm:$0xf]
        %v1197 = vld [vmem:[%s345 + $0x30] sm:$0xff]
        %v1198 = vld [vmem:[%s345 + $0x38] sm:$0xf]
        %v1199 = vld [vmem:[%s345 + $0x3c] sm:$0xff]
        %v1200 = vld [vmem:[%s345 + $0x44] sm:$0xf]
        %v1201 = vld [vmem:[%s345 + $0x48] sm:$0xff]
        %v1202 = vld [vmem:[%s345 + $0x50] sm:$0xf]
        %v1203 = vld [vmem:[%s345 + $0x54] sm:$0xff]
        %v1204 = vld [vmem:[%s345 + $0x5c] sm:$0xf]
        %v1205 = vld [vmem:[%s345 + $0x60] sm:$0xff]
        %v1206 = vld [vmem:[%s345 + $0x68] sm:$0xf]
        %v1207 = vld [vmem:[%s345 + $0x6c] sm:$0xff]
        %v1208 = vld [vmem:[%s345 + $0x74] sm:$0xf]
        %v1209 = vld [vmem:[%s345 + $0x78] sm:$0xff]
        %v1210 = vld [vmem:[%s345 + $0x80] sm:$0xf]
        %v1211 = vld [vmem:[%s345 + $0x84] sm:$0xff]
        %v1212 = vld [vmem:[%s345 + $0x8c] sm:$0xf]
        %v1213 = vld [vmem:[%s345 + $0x90] sm:$0xff]
        %v1214 = vld [vmem:[%s345 + $0x98] sm:$0xf]
        %v1215 = vld [vmem:[%s345 + $0x9c] sm:$0xff]
        %v1216 = vld [vmem:[%s345 + $0xa4] sm:$0xf]
        %v1217 = vld [vmem:[%s345 + $0xa8] sm:$0xff]
        %v1218 = vld [vmem:[%s345 + $0xb0] sm:$0xf]
        %v1219 = vld [vmem:[%s345 + $0xb4] sm:$0xff]
        %v1220 = vld [vmem:[%s345 + $0xbc] sm:$0xf]
        %v1221 = vld [vmem:[%s345 + $0xc0] sm:$0xff]
        %v1222 = vld [vmem:[%s345 + $0xc8] sm:$0xf]
        %v1223 = vld [vmem:[%s345 + $0xcc] sm:$0xff]
        %v1224 = vld [vmem:[%s345 + $0xd4] sm:$0xf]
        %v1225 = vld [vmem:[%s345 + $0xd8] sm:$0xff]
        %v1226 = vld [vmem:[%s345 + $0xe0] sm:$0xf]
        %v1227 = vld [vmem:[%s345 + $0xe4] sm:$0xff]
        %v1228 = vld [vmem:[%s345 + $0xec] sm:$0xf]
        %v1229 = vld [vmem:[%s345 + $0xf0] sm:$0xff]
        %v1230 = vld [vmem:[%s345 + $0xf8] sm:$0xf]
        %v1231 = vld [vmem:[%s345 + $0xfc] sm:$0xff]
        %v1232 = vld [vmem:[%s345 + $0x104] sm:$0xf]
        %v1233 = vld [vmem:[%s345 + $0x108] sm:$0xff]
        %v1234 = vld [vmem:[%s345 + $0x110] sm:$0xf]
        %v1235 = vld [vmem:[%s345 + $0x114] sm:$0xff]
        %v1236 = vld [vmem:[%s345 + $0x11c] sm:$0xf]
        %v1237 = vld [vmem:[%s345 + $0x120] sm:$0xff]
        %v1238 = vld [vmem:[%s345 + $0x128] sm:$0xf]
        %v1239 = vld [vmem:[%s345 + $0x12c] sm:$0xff]
        %v1240 = vld [vmem:[%s345 + $0x134] sm:$0xf]
        %v1241 = vld [vmem:[%s345 + $0x138] sm:$0xff]
        %v1242 = vld [vmem:[%s345 + $0x140] sm:$0xf]
        %v1243 = vld [vmem:[%s345 + $0x144] sm:$0xff]
        %v1244 = vld [vmem:[%s345 + $0x14c] sm:$0xf]
        %v1245 = vld [vmem:[%s345 + $0x150] sm:$0xff]
        %v1246 = vld [vmem:[%s345 + $0x158] sm:$0xf]
        %v1247 = vld [vmem:[%s345 + $0x15c] sm:$0xff]
        %v1248 = vld [vmem:[%s345 + $0x164] sm:$0xf]
        %v1249 = vld [vmem:[%s345 + $0x168] sm:$0xff]
        %v1250 = vld [vmem:[%s345 + $0x170] sm:$0xf]
        %v1251 = vld [vmem:[%s345 + $0x174] sm:$0xff]
        %v1252 = vld [vmem:[%s345 + $0x17c] sm:$0xf]
        %v1253 = vld [vmem:[%s345 + $0x180] sm:$0xff]
        %v1254 = vld [vmem:[%s345 + $0x188] sm:$0xf]
        %v1255 = vld [vmem:[%s345 + $0x18c] sm:$0xff]
        %v1256 = vld [vmem:[%s345 + $0x194] sm:$0xf]
        %v1257 = vld [vmem:[%s345 + $0x198] sm:$0xff]
        %v1258 = vld [vmem:[%s345 + $0x1a0] sm:$0xf]
        %v1259 = vld [vmem:[%s345 + $0x1a4] sm:$0xff]
        %v1260 = vld [vmem:[%s345 + $0x1ac] sm:$0xf]
        %v1261 = vld [vmem:[%s345 + $0x1b0] sm:$0xff]
        %v1262 = vld [vmem:[%s345 + $0x1b8] sm:$0xf]
        %v1263 = vld [vmem:[%s345 + $0x1bc] sm:$0xff]
        %v1264 = vld [vmem:[%s345 + $0x1c4] sm:$0xf]
        %v1265 = vld [vmem:[%s345 + $0x1c8] sm:$0xff]
        %v1266 = vld [vmem:[%s345 + $0x1d0] sm:$0xf]
        %v1267 = vld [vmem:[%s345 + $0x1d4] sm:$0xff]
        %v1268 = vld [vmem:[%s345 + $0x1dc] sm:$0xf]
        %v1269 = vld [vmem:[%s345 + $0x1e0] sm:$0xff]
        %v1270 = vld [vmem:[%s345 + $0x1e8] sm:$0xf]
        %v1271 = vld [vmem:[%s345 + $0x1ec] sm:$0xff]
        %v1272 = vld [vmem:[%s345 + $0x1f4] sm:$0xf]
        %v1273 = vld [vmem:[%s345 + $0x1f8] sm:$0xff]
        %v1274 = vld [vmem:[%s345 + $0x200] sm:$0xf]
        %v1275 = vld [vmem:[%s345 + $0x204] sm:$0xff]
        %v1276 = vld [vmem:[%s345 + $0x20c] sm:$0xf]
        %v1277 = vld [vmem:[%s345 + $0x210] sm:$0xff]
        %v1278 = vld [vmem:[%s345 + $0x218] sm:$0xf]
        %v1279 = vld [vmem:[%s345 + $0x21c] sm:$0xff]
        %v1280 = vld [vmem:[%s345 + $0x224] sm:$0xf]
        %v1281 = vld [vmem:[%s345 + $0x228] sm:$0xff]
        %v1282 = vld [vmem:[%s345 + $0x230] sm:$0xf]
        %v1283 = vld [vmem:[%s345 + $0x234] sm:$0xff]
        %v1284 = vld [vmem:[%s345 + $0x23c] sm:$0xf]
        %v1285 = vld [vmem:[%s345 + $0x240] sm:$0xff]
        %v1286 = vld [vmem:[%s345 + $0x248] sm:$0xf]
        %v1287 = vld [vmem:[%s345 + $0x24c] sm:$0xff]
        %v1288 = vld [vmem:[%s345 + $0x254] sm:$0xf]
        %v1289 = vld [vmem:[%s345 + $0x258] sm:$0xff]
        %v1290 = vld [vmem:[%s345 + $0x260] sm:$0xf]
        %v1291 = vld [vmem:[%s345 + $0x264] sm:$0xff]
        %v1292 = vld [vmem:[%s345 + $0x26c] sm:$0xf]
        %v1293 = vld [vmem:[%s345 + $0x270] sm:$0xff]
        %v1294 = vld [vmem:[%s345 + $0x278] sm:$0xf]
        %v1295 = vld [vmem:[%s345 + $0x27c] sm:$0xff]
        %v1296 = vld [vmem:[%s345 + $0x284] sm:$0xf]
        %v1297 = vld [vmem:[%s345 + $0x288] sm:$0xff]
        %v1298 = vld [vmem:[%s345 + $0x290] sm:$0xf]
        %v1299 = vld [vmem:[%s345 + $0x294] sm:$0xff]
        %v1300 = vld [vmem:[%s345 + $0x29c] sm:$0xf]
        %v1301 = vld [vmem:[%s345 + $0x2a0] sm:$0xff]
        %v1302 = vld [vmem:[%s345 + $0x2a8] sm:$0xf]
        %v1303 = vld [vmem:[%s345 + $0x2ac] sm:$0xff]
        %v1304 = vld [vmem:[%s345 + $0x2b4] sm:$0xf]
        %v1305 = vld [vmem:[%s345 + $0x2b8] sm:$0xff]
        %v1306 = vld [vmem:[%s345 + $0x2c0] sm:$0xf]
        %v1307 = vld [vmem:[%s345 + $0x2c4] sm:$0xff]
        %v1308 = vld [vmem:[%s345 + $0x2cc] sm:$0xf]
        %v1309 = vld [vmem:[%s345 + $0x2d0] sm:$0xff]
        %v1310 = vld [vmem:[%s345 + $0x2d8] sm:$0xf]
        %v1311 = vld [vmem:[%s345 + $0x2dc] sm:$0xff]
        %v1312 = vld [vmem:[%s345 + $0x2e4] sm:$0xf]
        %v1313 = vld [vmem:[%s345 + $0x2e8] sm:$0xff]
        %v1314 = vld [vmem:[%s345 + $0x2f0] sm:$0xf]
        %v1315 = vld [vmem:[%s345 + $0x2f4] sm:$0xff]
        %v1316 = vld [vmem:[%s345 + $0x2fc] sm:$0xf]
        %v1445 = vunpack.c.l.b16 %v1189
        %v1446 = vunpack.c.h.b16 %v1189
        %v1447 = vunpack.c.l.b16 %v1190
        %v1448 = vunpack.c.l.b16 %v1191
        %v1449 = vunpack.c.h.b16 %v1191
        %v1450 = vunpack.c.l.b16 %v1192
        %v1451 = vunpack.c.l.b16 %v1193
        %v1452 = vunpack.c.h.b16 %v1193
        %v1453 = vunpack.c.l.b16 %v1194
        %v1454 = vunpack.c.l.b16 %v1195
        %v1455 = vunpack.c.h.b16 %v1195
        %v1456 = vunpack.c.l.b16 %v1196
        %v1457 = vunpack.c.l.b16 %v1197
        %v1458 = vunpack.c.h.b16 %v1197
        %v1459 = vunpack.c.l.b16 %v1198
        %v1460 = vunpack.c.l.b16 %v1199
        %v1461 = vunpack.c.h.b16 %v1199
        %v1462 = vunpack.c.l.b16 %v1200
        %v1463 = vunpack.c.l.b16 %v1201
        %v1464 = vunpack.c.h.b16 %v1201
        %v1465 = vunpack.c.l.b16 %v1202
        %v1466 = vunpack.c.l.b16 %v1203
        %v1467 = vunpack.c.h.b16 %v1203
        %v1468 = vunpack.c.l.b16 %v1204
        %v1469 = vunpack.c.l.b16 %v1205
        %v1470 = vunpack.c.h.b16 %v1205
        %v1471 = vunpack.c.l.b16 %v1206
        %v1472 = vunpack.c.l.b16 %v1207
        %v1473 = vunpack.c.h.b16 %v1207
        %v1474 = vunpack.c.l.b16 %v1208
        %v1475 = vunpack.c.l.b16 %v1209
        %v1476 = vunpack.c.h.b16 %v1209
        %v1477 = vunpack.c.l.b16 %v1210
        %v1478 = vunpack.c.l.b16 %v1211
        %v1479 = vunpack.c.h.b16 %v1211
        %v1480 = vunpack.c.l.b16 %v1212
        %v1481 = vunpack.c.l.b16 %v1213
        %v1482 = vunpack.c.h.b16 %v1213
        %v1483 = vunpack.c.l.b16 %v1214
        %v1484 = vunpack.c.l.b16 %v1215
        %v1485 = vunpack.c.h.b16 %v1215
        %v1486 = vunpack.c.l.b16 %v1216
        %v1487 = vunpack.c.l.b16 %v1217
        %v1488 = vunpack.c.h.b16 %v1217
        %v1489 = vunpack.c.l.b16 %v1218
        %v1490 = vunpack.c.l.b16 %v1219
        %v1491 = vunpack.c.h.b16 %v1219
        %v1492 = vunpack.c.l.b16 %v1220
        %v1493 = vunpack.c.l.b16 %v1221
        %v1494 = vunpack.c.h.b16 %v1221
        %v1495 = vunpack.c.l.b16 %v1222
        %v1496 = vunpack.c.l.b16 %v1223
        %v1497 = vunpack.c.h.b16 %v1223
        %v1498 = vunpack.c.l.b16 %v1224
        %v1499 = vunpack.c.l.b16 %v1225
        %v1500 = vunpack.c.h.b16 %v1225
        %v1501 = vunpack.c.l.b16 %v1226
        %v1502 = vunpack.c.l.b16 %v1227
        %v1503 = vunpack.c.h.b16 %v1227
        %v1504 = vunpack.c.l.b16 %v1228
        %v1505 = vunpack.c.l.b16 %v1229
        %v1506 = vunpack.c.h.b16 %v1229
        %v1507 = vunpack.c.l.b16 %v1230
        %v1508 = vunpack.c.l.b16 %v1231
        %v1509 = vunpack.c.h.b16 %v1231
        %v1510 = vunpack.c.l.b16 %v1232
        %v1511 = vunpack.c.l.b16 %v1233
        %v1512 = vunpack.c.h.b16 %v1233
        %v1513 = vunpack.c.l.b16 %v1234
        %v1514 = vunpack.c.l.b16 %v1235
        %v1515 = vunpack.c.h.b16 %v1235
        %v1516 = vunpack.c.l.b16 %v1236
        %v1517 = vunpack.c.l.b16 %v1237
        %v1518 = vunpack.c.h.b16 %v1237
        %v1519 = vunpack.c.l.b16 %v1238
        %v1520 = vunpack.c.l.b16 %v1239
        %v1521 = vunpack.c.h.b16 %v1239
        %v1522 = vunpack.c.l.b16 %v1240
        %v1523 = vunpack.c.l.b16 %v1241
        %v1524 = vunpack.c.h.b16 %v1241
        %v1525 = vunpack.c.l.b16 %v1242
        %v1526 = vunpack.c.l.b16 %v1243
        %v1527 = vunpack.c.h.b16 %v1243
        %v1528 = vunpack.c.l.b16 %v1244
        %v1529 = vunpack.c.l.b16 %v1245
        %v1530 = vunpack.c.h.b16 %v1245
        %v1531 = vunpack.c.l.b16 %v1246
        %v1532 = vunpack.c.l.b16 %v1247
        %v1533 = vunpack.c.h.b16 %v1247
        %v1534 = vunpack.c.l.b16 %v1248
        %v1535 = vunpack.c.l.b16 %v1249
        %v1536 = vunpack.c.h.b16 %v1249
        %v1537 = vunpack.c.l.b16 %v1250
        %v1538 = vunpack.c.l.b16 %v1251
        %v1539 = vunpack.c.h.b16 %v1251
        %v1540 = vunpack.c.l.b16 %v1252
        %v1541 = vunpack.c.l.b16 %v1253
        %v1542 = vunpack.c.h.b16 %v1253
        %v1543 = vunpack.c.l.b16 %v1254
        %v1544 = vunpack.c.l.b16 %v1255
        %v1545 = vunpack.c.h.b16 %v1255
        %v1546 = vunpack.c.l.b16 %v1256
        %v1547 = vunpack.c.l.b16 %v1257
        %v1548 = vunpack.c.h.b16 %v1257
        %v1549 = vunpack.c.l.b16 %v1258
        %v1550 = vunpack.c.l.b16 %v1259
        %v1551 = vunpack.c.h.b16 %v1259
        %v1552 = vunpack.c.l.b16 %v1260
        %v1553 = vunpack.c.l.b16 %v1261
        %v1554 = vunpack.c.h.b16 %v1261
        %v1555 = vunpack.c.l.b16 %v1262
        %v1556 = vunpack.c.l.b16 %v1263
        %v1557 = vunpack.c.h.b16 %v1263
        %v1558 = vunpack.c.l.b16 %v1264
        %v1559 = vunpack.c.l.b16 %v1265
        %v1560 = vunpack.c.h.b16 %v1265
        %v1561 = vunpack.c.l.b16 %v1266
        %v1562 = vunpack.c.l.b16 %v1267
        %v1563 = vunpack.c.h.b16 %v1267
        %v1564 = vunpack.c.l.b16 %v1268
        %v1565 = vunpack.c.l.b16 %v1269
        %v1566 = vunpack.c.h.b16 %v1269
        %v1567 = vunpack.c.l.b16 %v1270
        %v1568 = vunpack.c.l.b16 %v1271
        %v1569 = vunpack.c.h.b16 %v1271
        %v1570 = vunpack.c.l.b16 %v1272
        %v1571 = vunpack.c.l.b16 %v1273
        %v1572 = vunpack.c.h.b16 %v1273
        %v1573 = vunpack.c.l.b16 %v1274
        %v1574 = vunpack.c.l.b16 %v1275
        %v1575 = vunpack.c.h.b16 %v1275
        %v1576 = vunpack.c.l.b16 %v1276
        %v1577 = vunpack.c.l.b16 %v1277
        %v1578 = vunpack.c.h.b16 %v1277
        %v1579 = vunpack.c.l.b16 %v1278
        %v1580 = vunpack.c.l.b16 %v1279
        %v1581 = vunpack.c.h.b16 %v1279
        %v1582 = vunpack.c.l.b16 %v1280
        %v1583 = vunpack.c.l.b16 %v1281
        %v1584 = vunpack.c.h.b16 %v1281
        %v1585 = vunpack.c.l.b16 %v1282
        %v1586 = vunpack.c.l.b16 %v1283
        %v1587 = vunpack.c.h.b16 %v1283
        %v1588 = vunpack.c.l.b16 %v1284
        %v1589 = vunpack.c.l.b16 %v1285
        %v1590 = vunpack.c.h.b16 %v1285
        %v1591 = vunpack.c.l.b16 %v1286
        %v1592 = vunpack.c.l.b16 %v1287
        %v1593 = vunpack.c.h.b16 %v1287
        %v1594 = vunpack.c.l.b16 %v1288
        %v1595 = vunpack.c.l.b16 %v1289
        %v1596 = vunpack.c.h.b16 %v1289
        %v1597 = vunpack.c.l.b16 %v1290
        %v1598 = vunpack.c.l.b16 %v1291
        %v1599 = vunpack.c.h.b16 %v1291
        %v1600 = vunpack.c.l.b16 %v1292
        %v1601 = vunpack.c.l.b16 %v1293
        %v1602 = vunpack.c.h.b16 %v1293
        %v1603 = vunpack.c.l.b16 %v1294
        %v1604 = vunpack.c.l.b16 %v1295
        %v1605 = vunpack.c.h.b16 %v1295
        %v1606 = vunpack.c.l.b16 %v1296
        %v1607 = vunpack.c.l.b16 %v1297
        %v1608 = vunpack.c.h.b16 %v1297
        %v1609 = vunpack.c.l.b16 %v1298
        %v1610 = vunpack.c.l.b16 %v1299
        %v1611 = vunpack.c.h.b16 %v1299
        %v1612 = vunpack.c.l.b16 %v1300
        %v1613 = vunpack.c.l.b16 %v1301
        %v1614 = vunpack.c.h.b16 %v1301
        %v1615 = vunpack.c.l.b16 %v1302
        %v1616 = vunpack.c.l.b16 %v1303
        %v1617 = vunpack.c.h.b16 %v1303
        %v1618 = vunpack.c.l.b16 %v1304
        %v1619 = vunpack.c.l.b16 %v1305
        %v1620 = vunpack.c.h.b16 %v1305
        %v1621 = vunpack.c.l.b16 %v1306
        %v1622 = vunpack.c.l.b16 %v1307
        %v1623 = vunpack.c.h.b16 %v1307
        %v1624 = vunpack.c.l.b16 %v1308
        %v1625 = vunpack.c.l.b16 %v1309
        %v1626 = vunpack.c.h.b16 %v1309
        %v1627 = vunpack.c.l.b16 %v1310
        %v1628 = vunpack.c.l.b16 %v1311
        %v1629 = vunpack.c.h.b16 %v1311
        %v1630 = vunpack.c.l.b16 %v1312
        %v1631 = vunpack.c.l.b16 %v1313
        %v1632 = vunpack.c.h.b16 %v1313
        %v1633 = vunpack.c.l.b16 %v1314
        %v1634 = vunpack.c.l.b16 %v1315
        %v1635 = vunpack.c.h.b16 %v1315
        %v1636 = vunpack.c.l.b16 %v1316
        %v1637 = vpack.c.b16 %v1448, %v1445
        %v1638 = vpack.c.b16 %v1449, %v1446
        %v1639 = vpack.c.b16 %v1450, %v1447
        %v1640 = vpack.c.b16 %v1454, %v1451
        %v1641 = vpack.c.b16 %v1455, %v1452
        %v1642 = vpack.c.b16 %v1456, %v1453
        %v1643 = vpack.c.b16 %v1460, %v1457
        %v1644 = vpack.c.b16 %v1461, %v1458
        %v1645 = vpack.c.b16 %v1462, %v1459
        %v1646 = vpack.c.b16 %v1466, %v1463
        %v1647 = vpack.c.b16 %v1467, %v1464
        %v1648 = vpack.c.b16 %v1468, %v1465
        %v1649 = vpack.c.b16 %v1472, %v1469
        %v1650 = vpack.c.b16 %v1473, %v1470
        %v1651 = vpack.c.b16 %v1474, %v1471
        %v1652 = vpack.c.b16 %v1478, %v1475
        %v1653 = vpack.c.b16 %v1479, %v1476
        %v1654 = vpack.c.b16 %v1480, %v1477
        %v1655 = vpack.c.b16 %v1484, %v1481
        %v1656 = vpack.c.b16 %v1485, %v1482
        %v1657 = vpack.c.b16 %v1486, %v1483
        %v1658 = vpack.c.b16 %v1490, %v1487
        %v1659 = vpack.c.b16 %v1491, %v1488
        %v1660 = vpack.c.b16 %v1492, %v1489
        %v1661 = vpack.c.b16 %v1496, %v1493
        %v1662 = vpack.c.b16 %v1497, %v1494
        %v1663 = vpack.c.b16 %v1498, %v1495
        %v1664 = vpack.c.b16 %v1502, %v1499
        %v1665 = vpack.c.b16 %v1503, %v1500
        %v1666 = vpack.c.b16 %v1504, %v1501
        %v1667 = vpack.c.b16 %v1508, %v1505
        %v1668 = vpack.c.b16 %v1509, %v1506
        %v1669 = vpack.c.b16 %v1510, %v1507
        %v1670 = vpack.c.b16 %v1514, %v1511
        %v1671 = vpack.c.b16 %v1515, %v1512
        %v1672 = vpack.c.b16 %v1516, %v1513
        %v1673 = vpack.c.b16 %v1520, %v1517
        %v1674 = vpack.c.b16 %v1521, %v1518
        %v1675 = vpack.c.b16 %v1522, %v1519
        %v1676 = vpack.c.b16 %v1526, %v1523
        %v1677 = vpack.c.b16 %v1527, %v1524
        %v1678 = vpack.c.b16 %v1528, %v1525
        %v1679 = vpack.c.b16 %v1532, %v1529
        %v1680 = vpack.c.b16 %v1533, %v1530
        %v1681 = vpack.c.b16 %v1534, %v1531
        %v1682 = vpack.c.b16 %v1538, %v1535
        %v1683 = vpack.c.b16 %v1539, %v1536
        %v1684 = vpack.c.b16 %v1540, %v1537
        %v1685 = vpack.c.b16 %v1544, %v1541
        %v1686 = vpack.c.b16 %v1545, %v1542
        %v1687 = vpack.c.b16 %v1546, %v1543
        %v1688 = vpack.c.b16 %v1550, %v1547
        %v1689 = vpack.c.b16 %v1551, %v1548
        %v1690 = vpack.c.b16 %v1552, %v1549
        %v1691 = vpack.c.b16 %v1556, %v1553
        %v1692 = vpack.c.b16 %v1557, %v1554
        %v1693 = vpack.c.b16 %v1558, %v1555
        %v1694 = vpack.c.b16 %v1562, %v1559
        %v1695 = vpack.c.b16 %v1563, %v1560
        %v1696 = vpack.c.b16 %v1564, %v1561
        %v1697 = vpack.c.b16 %v1568, %v1565
        %v1698 = vpack.c.b16 %v1569, %v1566
        %v1699 = vpack.c.b16 %v1570, %v1567
        %v1700 = vpack.c.b16 %v1574, %v1571
        %v1701 = vpack.c.b16 %v1575, %v1572
        %v1702 = vpack.c.b16 %v1576, %v1573
        %v1703 = vpack.c.b16 %v1580, %v1577
        %v1704 = vpack.c.b16 %v1581, %v1578
        %v1705 = vpack.c.b16 %v1582, %v1579
        %v1706 = vpack.c.b16 %v1586, %v1583
        %v1707 = vpack.c.b16 %v1587, %v1584
        %v1708 = vpack.c.b16 %v1588, %v1585
        %v1709 = vpack.c.b16 %v1592, %v1589
        %v1710 = vpack.c.b16 %v1593, %v1590
        %v1711 = vpack.c.b16 %v1594, %v1591
        %v1712 = vpack.c.b16 %v1598, %v1595
        %v1713 = vpack.c.b16 %v1599, %v1596
        %v1714 = vpack.c.b16 %v1600, %v1597
        %v1715 = vpack.c.b16 %v1604, %v1601
        %v1716 = vpack.c.b16 %v1605, %v1602
        %v1717 = vpack.c.b16 %v1606, %v1603
        %v1718 = vpack.c.b16 %v1610, %v1607
        %v1719 = vpack.c.b16 %v1611, %v1608
        %v1720 = vpack.c.b16 %v1612, %v1609
        %v1721 = vpack.c.b16 %v1616, %v1613
        %v1722 = vpack.c.b16 %v1617, %v1614
        %v1723 = vpack.c.b16 %v1618, %v1615
        %v1724 = vpack.c.b16 %v1622, %v1619
        %v1725 = vpack.c.b16 %v1623, %v1620
        %v1726 = vpack.c.b16 %v1624, %v1621
        %v1727 = vpack.c.b16 %v1628, %v1625
        %v1728 = vpack.c.b16 %v1629, %v1626
        %v1729 = vpack.c.b16 %v1630, %v1627
        %v1730 = vpack.c.b16 %v1634, %v1631
        %v1731 = vpack.c.b16 %v1635, %v1632
        %v1732 = vpack.c.b16 %v1636, %v1633
        %1829 = vmatpush.bf16.msra.mxu0 %v1658
        %1830 = vmatpush.bf16.msra.mxu0 %v1655
        %1831 = vmatpush.bf16.msra.mxu0 %v1652
        %1832 = vmatpush.bf16.msra.mxu0 %v1649
        %1833 = vmatpush.bf16.msra.mxu0 %v1646
        %1834 = vmatpush.bf16.msra.mxu0 %v1643
        %1835 = vmatpush.bf16.msra.mxu0 %v1640
        %1836 = vmatpush.bf16.msra.mxu0 %v1637
        %1837 = vmatmul.bf16.gmra.mxu0 %v1185
        %v1838 = vpop.f32.mrf.mxu0
        %v1839 = vadd.f32 0.0, %v1838
        %v1840 = vpop.f32.mrf.mxu0
        %v1841 = vadd.f32 0.0, %v1840
        %1842 = vdwg.mxu0
        %1843 = vmatpush.bf16.msra.mxu0 %v1682
        %1844 = vmatpush.bf16.msra.mxu0 %v1679
        %1845 = vmatpush.bf16.msra.mxu0 %v1676
        %1846 = vmatpush.bf16.msra.mxu0 %v1673
        %1847 = vmatpush.bf16.msra.mxu0 %v1670
        %1848 = vmatpush.bf16.msra.mxu0 %v1667
        %1849 = vmatpush.bf16.msra.mxu0 %v1664
        %1850 = vmatpush.bf16.msra.mxu0 %v1661
        %1851 = vmatmul.bf16.gmra.mxu0 %v1186
        %v1852 = vpop.f32.mrf.mxu0
        %v1853 = vadd.f32 %v1839, %v1852
        %v1854 = vpop.f32.mrf.mxu0
        %v1855 = vadd.f32 %v1841, %v1854
        %1856 = vdwg.mxu0
        %1857 = vmatpush.bf16.msra.mxu0 %v1706
        %1858 = vmatpush.bf16.msra.mxu0 %v1703
        %1859 = vmatpush.bf16.msra.mxu0 %v1700
        %1860 = vmatpush.bf16.msra.mxu0 %v1697
        %1861 = vmatpush.bf16.msra.mxu0 %v1694
        %1862 = vmatpush.bf16.msra.mxu0 %v1691
        %1863 = vmatpush.bf16.msra.mxu0 %v1688
        %1864 = vmatpush.bf16.msra.mxu0 %v1685
        %1865 = vmatmul.bf16.gmra.mxu0 %v1187
        %v1866 = vpop.f32.mrf.mxu0
        %v1867 = vadd.f32 %v1853, %v1866
        %v1868 = vpop.f32.mrf.mxu0
        %v1869 = vadd.f32 %v1855, %v1868
        %1870 = vdwg.mxu0
        %1871 = vmatpush.bf16.msra.mxu0 %v1730
        %1872 = vmatpush.bf16.msra.mxu0 %v1727
        %1873 = vmatpush.bf16.msra.mxu0 %v1724
        %1874 = vmatpush.bf16.msra.mxu0 %v1721
        %1875 = vmatpush.bf16.msra.mxu0 %v1718
        %1876 = vmatpush.bf16.msra.mxu0 %v1715
        %1877 = vmatpush.bf16.msra.mxu0 %v1712
        %1878 = vmatpush.bf16.msra.mxu0 %v1709
        %1879 = vmatmul.bf16.gmra.mxu0 %v1188
        %v1880 = vpop.f32.mrf.mxu0
        %v1881 = vadd.f32 %v1867, %v1880
        %v1882 = vpop.f32.mrf.mxu0
        %v1883 = vadd.f32 %v1869, %v1882
        %1884 = vdwg.mxu0
        %1885 = vmatpush.bf16.msra.mxu0 %v1659
        %1886 = vmatpush.bf16.msra.mxu0 %v1656
        %1887 = vmatpush.bf16.msra.mxu0 %v1653
        %1888 = vmatpush.bf16.msra.mxu0 %v1650
        %1889 = vmatpush.bf16.msra.mxu0 %v1647
        %1890 = vmatpush.bf16.msra.mxu0 %v1644
        %1891 = vmatpush.bf16.msra.mxu0 %v1641
        %1892 = vmatpush.bf16.msra.mxu0 %v1638
        %1893 = vmatmul.bf16.gmra.mxu0 %v1185
        %v1894 = vpop.f32.mrf.mxu0
        %v1895 = vadd.f32 0.0, %v1894
        %v1896 = vpop.f32.mrf.mxu0
        %v1897 = vadd.f32 0.0, %v1896
        %1898 = vdwg.mxu0
        %1899 = vmatpush.bf16.msra.mxu0 %v1683
        %1900 = vmatpush.bf16.msra.mxu0 %v1680
        %1901 = vmatpush.bf16.msra.mxu0 %v1677
        %1902 = vmatpush.bf16.msra.mxu0 %v1674
        %1903 = vmatpush.bf16.msra.mxu0 %v1671
        %1904 = vmatpush.bf16.msra.mxu0 %v1668
        %1905 = vmatpush.bf16.msra.mxu0 %v1665
        %1906 = vmatpush.bf16.msra.mxu0 %v1662
        %1907 = vmatmul.bf16.gmra.mxu0 %v1186
        %v1908 = vpop.f32.mrf.mxu0
        %v1909 = vadd.f32 %v1895, %v1908
        %v1910 = vpop.f32.mrf.mxu0
        %v1911 = vadd.f32 %v1897, %v1910
        %1912 = vdwg.mxu0
        %1913 = vmatpush.bf16.msra.mxu0 %v1707
        %1914 = vmatpush.bf16.msra.mxu0 %v1704
        %1915 = vmatpush.bf16.msra.mxu0 %v1701
        %1916 = vmatpush.bf16.msra.mxu0 %v1698
        %1917 = vmatpush.bf16.msra.mxu0 %v1695
        %1918 = vmatpush.bf16.msra.mxu0 %v1692
        %1919 = vmatpush.bf16.msra.mxu0 %v1689
        %1920 = vmatpush.bf16.msra.mxu0 %v1686
        %1921 = vmatmul.bf16.gmra.mxu0 %v1187
        %v1922 = vpop.f32.mrf.mxu0
        %v1923 = vadd.f32 %v1909, %v1922
        %v1924 = vpop.f32.mrf.mxu0
        %v1925 = vadd.f32 %v1911, %v1924
        %1926 = vdwg.mxu0
        %1927 = vmatpush.bf16.msra.mxu0 %v1731
        %1928 = vmatpush.bf16.msra.mxu0 %v1728
        %1929 = vmatpush.bf16.msra.mxu0 %v1725
        %1930 = vmatpush.bf16.msra.mxu0 %v1722
        %1931 = vmatpush.bf16.msra.mxu0 %v1719
        %1932 = vmatpush.bf16.msra.mxu0 %v1716
        %1933 = vmatpush.bf16.msra.mxu0 %v1713
        %1934 = vmatpush.bf16.msra.mxu0 %v1710
        %1935 = vmatmul.bf16.gmra.mxu0 %v1188
        %v1936 = vpop.f32.mrf.mxu0
        %v1937 = vadd.f32 %v1923, %v1936
        %v1938 = vpop.f32.mrf.mxu0
        %v1939 = vadd.f32 %v1925, %v1938
        %1940 = vdwg.mxu0
        %1941 = vmatpush.bf16.msra.mxu0 %v1660
        %1942 = vmatpush.bf16.msra.mxu0 %v1657
        %1943 = vmatpush.bf16.msra.mxu0 %v1654
        %1944 = vmatpush.bf16.msra.mxu0 %v1651
        %1945 = vmatpush.bf16.msra.mxu0 %v1648
        %1946 = vmatpush.bf16.msra.mxu0 %v1645
        %1947 = vmatpush.bf16.msra.mxu0 %v1642
        %1948 = vmatpush.bf16.msra.mxu0 %v1639
        %1949 = vmatmul.bf16.gmra.mxu0 %v1185
        %v1950 = vpop.f32.mrf.mxu0
        %v1951 = vadd.f32 0.0, %v1950
        %v1952 = vpop.f32.mrf.mxu0
        %v1953 = vadd.f32 0.0, %v1952
        %1954 = vdwg.mxu0
        %1955 = vmatpush.bf16.msra.mxu0 %v1684
        %1956 = vmatpush.bf16.msra.mxu0 %v1681
        %1957 = vmatpush.bf16.msra.mxu0 %v1678
        %1958 = vmatpush.bf16.msra.mxu0 %v1675
        %1959 = vmatpush.bf16.msra.mxu0 %v1672
        %1960 = vmatpush.bf16.msra.mxu0 %v1669
        %1961 = vmatpush.bf16.msra.mxu0 %v1666
        %1962 = vmatpush.bf16.msra.mxu0 %v1663
        %1963 = vmatmul.bf16.gmra.mxu0 %v1186
        %v1964 = vpop.f32.mrf.mxu0
        %v1965 = vadd.f32 %v1951, %v1964
        %v1966 = vpop.f32.mrf.mxu0
        %v1967 = vadd.f32 %v1953, %v1966
        %1968 = vdwg.mxu0
        %1969 = vmatpush.bf16.msra.mxu0 %v1708
        %1970 = vmatpush.bf16.msra.mxu0 %v1705
        %1971 = vmatpush.bf16.msra.mxu0 %v1702
        %1972 = vmatpush.bf16.msra.mxu0 %v1699
        %1973 = vmatpush.bf16.msra.mxu0 %v1696
        %1974 = vmatpush.bf16.msra.mxu0 %v1693
        %1975 = vmatpush.bf16.msra.mxu0 %v1690
        %1976 = vmatpush.bf16.msra.mxu0 %v1687
        %1977 = vmatmul.bf16.gmra.mxu0 %v1187
        %v1978 = vpop.f32.mrf.mxu0
        %v1979 = vadd.f32 %v1965, %v1978
        %v1980 = vpop.f32.mrf.mxu0
        %v1981 = vadd.f32 %v1967, %v1980
        %1982 = vdwg.mxu0
        %1983 = vmatpush.bf16.msra.mxu0 %v1732
        %1984 = vmatpush.bf16.msra.mxu0 %v1729
        %1985 = vmatpush.bf16.msra.mxu0 %v1726
        %1986 = vmatpush.bf16.msra.mxu0 %v1723
        %1987 = vmatpush.bf16.msra.mxu0 %v1720
        %1988 = vmatpush.bf16.msra.mxu0 %v1717
        %1989 = vmatpush.bf16.msra.mxu0 %v1714
        %1990 = vmatpush.bf16.msra.mxu0 %v1711
        %1991 = vmatmul.bf16.gmra.mxu0 %v1188
        %v1992 = vpop.f32.mrf.mxu0
        %v1993 = vadd.f32 %v1979, %v1992
        %v1994 = vpop.f32.mrf.mxu0
        %v1995 = vadd.f32 %v1981, %v1994
        %1996 = vdwg.mxu0
        %v1997 = vadd.f32 %v1179, %v1881
        %v1998 = vadd.f32 %v1180, %v1937
        %v1999 = vadd.f32 %v1181, %v1993
        %v2000 = vadd.f32 %v1182, %v1883
        %v2001 = vadd.f32 %v1183, %v1939
        %v2002 = vadd.f32 %v1184, %v1995
        %2003 = vst [vmem:[#allocation2] sm:$0xff] %v1997
        %2004 = vst [vmem:[#allocation2 + $0x8] sm:$0xff] %v1998
        %2005 = vst [vmem:[#allocation2 + $0x10] sm:$0xff] %v1999
        %2006 = vst [vmem:[#allocation2 + $0x18] sm:$0xff] %v2000
        %2007 = vst [vmem:[#allocation2 + $0x20] sm:$0xff] %v2001
        %2008 = vst [vmem:[#allocation2 + $0x28] sm:$0xff] %v2002
        %p2009 = scmp.eq.s32.totalorder %s33, 2
        // Predicated region
        $region65: #{tpu_custom_call.1} parent=39 // pred_check
          %p2010 = pneg %p2009
        $region66: #{tpu_custom_call.1} parent=39 // pred_check_branch
          %2012 = sbr.rel (%p2010) target = $region68
        $region67: #{tpu_custom_call.1} parent=39 // pred_region
          %v2013 = vld [vmem:[#allocation2] sm:$0xff]
          %v2014 = vld [vmem:[#allocation2 + $0x8] sm:$0xff]
          %v2015 = vld [vmem:[#allocation2 + $0x10] sm:$0xff]
          %v2016 = vld [vmem:[#allocation2 + $0x18] sm:$0xff]
          %v2017 = vld [vmem:[#allocation2 + $0x20] sm:$0xff]
          %v2018 = vld [vmem:[#allocation2 + $0x28] sm:$0xff]
          %v2019 = vld [vmem:[#allocation11] sm:$0x7]
          %v2021 = vperm.slane %v2019, 0
          %v2022 = vperm.slane %v2019, 1
          %v2023 = vperm.slane %v2019, 2
          %v2027 = vadd.f32 %v2013, %v2021
          %v2028 = vadd.f32 %v2014, %v2022
          %v2029 = vadd.f32 %v2015, %v2023
          %v2030 = vadd.f32 %v2016, %v2021
          %v2031 = vadd.f32 %v2017, %v2022
          %v2032 = vadd.f32 %v2018, %v2023
          %2033 = vst [vmem:[%s392] sm:$0xff] %v2027
          %2034 = vst [vmem:[%s392 + $0x8] sm:$0xff] %v2028
          %2035 = vst [vmem:[%s392 + $0x10] sm:$0xff] %v2029
          %2036 = vst [vmem:[%s392 + $0x18] sm:$0xff] %v2030
          %2037 = vst [vmem:[%s392 + $0x20] sm:$0xff] %v2031
          %2038 = vst [vmem:[%s392 + $0x28] sm:$0xff] %v2032
        $region68: #{tpu_custom_call.1} parent=39 // pred_fallthru
          _
        %s2039 = sand.u32 %s173, 1
        %s2040 = scalar_lea.sflag [#allocation5], %s2039
        %s2041 = sand.u32 %s173, 1
        %s2042 = smul.addr %s2041, 48
        %s2043 = scalar_lea.vmem [#allocation12], %s2042
        // Predicated region
        $region69: #{tpu_custom_call.1} parent=39 // pred_check
          %p2044 = pneg %p183
        $region70: #{tpu_custom_call.1} parent=39 // pred_check_branch
          %2046 = sbr.rel (%p2044) target = $region72
        $region71: #{tpu_custom_call.1} parent=39 // pred_region
          %s2047 = smul.u32 2, %s32
          %2049 = vsyncadd %s2040, 0
          %s2050 = smul.addr %s2047, 3
          %s2051 = smul.addr %s2050, 8
          %s2052 = scalar_lea.hbm %s5, %s2051
          %s2053 = sshll.u32 %s2043, 4
          %s2054 = int_to_ptr.vmem [resolvable:$true] %s2053
          %s2055 = sshll.u32 %s2052, 4
          %s2056 = int_to_ptr.hbm [resolvable:$true] %s2055
          %2061 = dma.vmem_to_hbm [thread:$0]  %s2054, 768, %s2056, %s2040, 384, 384, 24
        $region72: #{tpu_custom_call.1} parent=39 // pred_fallthru
          _
      $region40: #{tpu_custom_call.1} parent=5 // pred_fallthru
        _
      %p2062 = scmp.le.s32.totalorder 2, %s23
      // Predicated region
      $region73: #{tpu_custom_call.1} parent=5 // pred_check
        %p2063 = pneg %p2062
      $region74: #{tpu_custom_call.1} parent=5 // pred_check_branch
        %2065 = sbr.rel (%p2063) target = $region76
      $region75: #{tpu_custom_call.1} parent=5 // pred_region
        %s2066 = ssub.s32 %s23, 2
        // Predicated region
        $region77: #{tpu_custom_call.1} parent=75 // pred_check
          %p2067 = pneg %p189
        $region78: #{tpu_custom_call.1} parent=75 // pred_check_branch
          %2069 = sbr.rel (%p2067) target = $region80
        $region79: #{tpu_custom_call.1} parent=75 // pred_region
          %s2070 = sand.u32 %s174, 1
          %s2071 = scalar_lea.sflag [#allocation5], %s2070
          %s2072 = sand.u32 %s174, 1
          %s2073 = smul.addr %s2072, 48
          %s2074 = scalar_lea.vmem [#allocation12], %s2073
          %2076 = dma.done %s2071, 768
        $region80: #{tpu_custom_call.1} parent=75 // pred_fallthru
          _
      $region76: #{tpu_custom_call.1} parent=5 // pred_fallthru
        _
    $region6: #{tpu_custom_call.1} parent=1 // loop_footer
      %s27 = sadd.s32 1, %s23
    $region7: #{tpu_custom_call.1} parent=1 // loop_footer_branch
      %22 = sbr.rel target = $region3
    $region8: #{tpu_custom_call.1} parent=1 // loop_exit
      _
    %2077 = vsyncpa [#allocation4], 1
    %s2078 = scalar_lea.sflag [#allocation4], 1
    %2079 = vsyncpa %s2078, 1
    %2080 = vsyncpa [#allocation7], 1
    %s2081 = scalar_lea.sflag [#allocation7], 1
    %2082 = vsyncpa %s2081, 1
    %2083 = vsyncpa [#allocation10], 1
    %s2084 = scalar_lea.sflag [#allocation10], 1
    %2085 = vsyncpa %s2084, 1
    %2086 = vsyncpa [#allocation5], 1
    %s2087 = scalar_lea.sflag [#allocation5], 1
    %2088 = vsyncpa %s2087, 1

</llo_original>
